<compile_context>
chip_gen: v5e
topology: v5e:2x2
jax: 0.10.0
libtpu: 0.0.40
codegen_flags: <defaults>
</compile_context>

<pallas_src>
import math
import functools

import jax
import jax.numpy as jnp
from jax.experimental import pallas as pl
from jax.experimental.pallas import tpu as pltpu


_HAS_EINSHAPE = hasattr(pltpu, "einshape")
POS_OFFSET = 0


# ------------------------------------------------------------------ small helpers
def _vmem_capacity_bytes():
    try:
        info = pltpu.get_tpu_info()
        cap = getattr(info, "vmem_capacity_bytes", None)
        if cap:
            return int(cap)
    except Exception:
        pass
    return 64 * 1024 * 1024          # conservative fallback


def _split_heads(x, bt, s, h, dh):
    """(bt*s, h*dh) -> (bt*h, s, dh): head-major, single collapsed batch dim."""
    x = x.reshape(bt, s, h, dh)
    if _HAS_EINSHAPE:
        x = pltpu.einshape("bshd->bhsd", x)
    else:
        x = jnp.transpose(x, (0, 2, 1, 3))
    return x.reshape(bt * h, s, dh)


def _merge_heads(x, bt, s, h, dh):
    """(bt*h, s, dh) -> (bt*s, h*dh)."""
    x = x.reshape(bt, h, s, dh)
    if _HAS_EINSHAPE:
        x = pltpu.einshape("bhsd->bshd", x)
    else:
        x = jnp.transpose(x, (0, 2, 1, 3))
    return x.reshape(bt * s, h * dh)


def _layernorm_f32(x, gamma, beta, eps=1e-5):
    x = x.astype(jnp.float32)
    mu = jnp.mean(x, axis=-1, keepdims=True)
    var = jnp.mean(jnp.square(x - mu), axis=-1, keepdims=True)
    return (x - mu) * jax.lax.rsqrt(var + eps) * gamma + beta


# ------------------------------------------------------------------ shared layer body
def _encoder_layer(xf, bias_bh, wqkv, bqkv, wo, bo, g1, b1, w1, bf1, w2, bf2, g2, b2,
                   *, Bt, S, H, cdt):
    """One post-LN BartEncoderLayer on flat f32 activations xf: (Bt*S, D) -> (Bt*S, D)."""
    M, D = xf.shape
    Dh = D // H
    scale = 1.0 / math.sqrt(Dh)
    xc = xf.astype(cdt)

    # Fused Q/K/V projection: one MXU pass with N = 3D, slices stay lane-aligned.
    qkv = jnp.dot(xc, wqkv, preferred_element_type=jnp.float32) + bqkv
    q = (qkv[:, :D] * scale).astype(cdt)
    k = qkv[:, D:2 * D].astype(cdt)
    v = qkv[:, 2 * D:].astype(cdt)

    # Batched attention over the collapsed (Bt*H) batch dim -- no per-row Python loop.
    qh = _split_heads(q, Bt, S, H, Dh)            # (Bt*H, S, Dh)
    kh = _split_heads(k, Bt, S, H, Dh)
    vh = _split_heads(v, Bt, S, H, Dh)
    # TODO(synk): for S >= ~512, tile over KV blocks with an online softmax
    # (flash-style) so the (Bt*H, S, S) f32 scores never fully materialize.
    sc = jnp.einsum("bqd,bkd->bqk", qh, kh, preferred_element_type=jnp.float32)
    sc = sc + bias_bh                             # additive key-padding bias (f32)
    sc = sc - jnp.max(sc, axis=-1, keepdims=True)
    p = jnp.exp(sc)
    p = p * pl.reciprocal(jnp.sum(p, axis=-1, keepdims=True), approx=True)
    ctx = jnp.einsum("bqk,bkd->bqd", p.astype(cdt), vh,
                     preferred_element_type=jnp.float32)      # (Bt*H, S, Dh)

    # TODO(synk): absorb the head merge into the output projection (wo viewed as
    # (H, Dh, D)) once Mosaic's dot_general handles the multi-dim contraction.
    ctx = _merge_heads(ctx.astype(cdt), Bt, S, H, Dh)         # (M, D)
    attn = jnp.dot(ctx, wo, preferred_element_type=jnp.float32) + bo
    y1 = _layernorm_f32(xf + attn, g1, b1)                    # post-LN, f32

    # Feed-forward.
    # TODO(synk): on v7x (64 MiB VMEM) stream W1/W2 in F-chunks (pltpu.emit_pipeline)
    # for large D/F instead of holding whole (D,F)/(F,D) blocks.
    # TODO(synk): HF BART 'gelu' is the exact erf GELU; tanh approximation used here.
    ff = jnp.dot(y1.astype(cdt), w1, preferred_element_type=jnp.float32) + bf1
    ff = jax.nn.gelu(ff, approximate=True).astype(cdt)
    ff2 = jnp.dot(ff, w2, preferred_element_type=jnp.float32) + bf2
    return _layernorm_f32(y1 + ff2, g2, b2)                   # (M, D) f32


# ------------------------------------------------------------------ kernels
def _streaming_kernel(tok_ref, pos_ref, eg_ref, eb_ref, bias_ref,
                      wqkv_ref, bqkv_ref, wo_ref, bo_ref, g1_ref, b1_ref,
                      w1_ref, bf1_ref, w2_ref, bf2_ref, g2_ref, b2_ref,
                      o_ref, x_ref, *, num_heads):
    """grid = (batch_tiles, num_layers); per-layer weights streamed (double-buffered)."""
    layer = pl.program_id(1)
    Bt, S, D = o_ref.shape
    H = num_heads
    cdt = wqkv_ref.dtype

    # layer-0 prologue: fused BartEmbeds add + layernorm_embedding into f32 scratch.
    @pl.when(layer == 0)
    def _():
        x0 = tok_ref[...].astype(jnp.float32) + pos_ref[...].astype(jnp.float32)
        x_ref[...] = _layernorm_f32(x0, eg_ref[...], eb_ref[...])

    bias_bh = jnp.broadcast_to(bias_ref[...][:, None],
                               (Bt, H, 1, S)).reshape(Bt * H, 1, S)

    xf = x_ref[...].reshape(Bt * S, D)
    y = _encoder_layer(xf, bias_bh,
                       wqkv_ref[0], bqkv_ref[0], wo_ref[0], bo_ref[0],
                       g1_ref[0], b1_ref[0], w1_ref[0], bf1_ref[0],
                       w2_ref[0], bf2_ref[0], g2_ref[0], b2_ref[0],
                       Bt=Bt, S=S, H=H, cdt=cdt)

    last = pl.num_programs(1) - 1

    @pl.when(layer < last)
    def _():
        x_ref[...] = y.reshape(Bt, S, D)

    @pl.when(layer == last)
    def _():
        o_ref[...] = y.reshape(Bt, S, D).astype(o_ref.dtype)


def _resident_kernel(tok_ref, pos_ref, eg_ref, eb_ref, bias_ref,
                     wqkv_ref, bqkv_ref, wo_ref, bo_ref, g1_ref, b1_ref,
                     w1_ref, bf1_ref, w2_ref, bf2_ref, g2_ref, b2_ref,
                     o_ref, *, num_heads, num_layers):
    """grid = (batch_tiles,); all stacked weights fetched once (VMEM-resident)."""
    Bt, S, D = o_ref.shape
    H = num_heads
    cdt = wqkv_ref.dtype

    x0 = tok_ref[...].astype(jnp.float32) + pos_ref[...].astype(jnp.float32)
    x = _layernorm_f32(x0, eg_ref[...], eb_ref[...]).reshape(Bt * S, D)

    bias_bh = jnp.broadcast_to(bias_ref[...][:, None],
                               (Bt, H, 1, S)).reshape(Bt * H, 1, S)

    def body(l, xf):
        return _encoder_layer(xf, bias_bh,
                              wqkv_ref[l], bqkv_ref[l], wo_ref[l], bo_ref[l],
                              g1_ref[l], b1_ref[l], w1_ref[l], bf1_ref[l],
                              w2_ref[l], bf2_ref[l], g2_ref[l], b2_ref[l],
                              Bt=Bt, S=S, H=H, cdt=cdt)

    x = jax.lax.fori_loop(0, num_layers, body, x)
    o_ref[...] = x.reshape(Bt, S, D).astype(o_ref.dtype)


# ------------------------------------------------------------------ wrapper
def _pick_batch_block(B, S, H, D, F, w_itemsize, vmem_cap):
    small_vmem = vmem_cap <= 80 * 1024 * 1024         # v7x-class (64 MiB)
    target_rows = 512 if small_vmem else 1024          # >= weight-stream ridge on v6e
    budget = int(0.55 * vmem_cap)

    def step_bytes(bt):
        m = bt * S
        act = 3 * m * D * 4                             # residual + f32 temps
        qkv = 3 * m * D * 4
        att = 2 * bt * H * S * S * 4                    # scores + probs (f32)
        ffn = m * F * 4
        wts = 2 * w_itemsize * (4 * D * D + 2 * D * F)  # double-buffered layer weights
        return act + qkv + att + ffn + wts

    best = 1
    for cand in range(1, B + 1):
        if B % cand == 0 and cand * S <= max(target_rows, S) and step_bytes(cand) <= budget:
            best = cand
    if small_vmem and (B // best) % 2 == 1:
        # v7x: 2 TensorCores per chip -> prefer an even number of batch tiles so the
        # "parallel" axis shards across both cores.
        for cand in range(best, 0, -1):
            if B % cand == 0 and (B // cand) % 2 == 0:
                best = cand
                break
    return best


def encoder_stack(tok, pos, emb_g, emb_b, attn_bias, layers, *, num_heads,
                  batch_block=None, weights_resident=None):
    B, S, D = tok.shape
    L = layers["wqkv"].shape[0]
    F = layers["w1"].shape[2]
    vmem_cap = _vmem_capacity_bytes()
    w_itemsize = layers["wqkv"].dtype.itemsize

    # TODO(synk): for real workloads pad S to a multiple of 128 (lane-dense scores/mask).
    bt = (_pick_batch_block(B, S, num_heads, D, F, w_itemsize, vmem_cap)
          if batch_block is None else batch_block)
    assert B % bt == 0, "batch_block must divide the batch size"
    nb = B // bt

    weight_bytes = sum(int(v.size) * v.dtype.itemsize for v in layers.values())
    if weights_resident is None:
        # v5e/v6e: weights resident when they fit comfortably; v7x / big models stream.
        weights_resident = weight_bytes <= int(0.4 * vmem_cap)

    vmem_limit = max(32 * 1024 * 1024,
                     min(int(0.85 * vmem_cap), 100 * 1024 * 1024))

    weight_args = (layers["wqkv"], layers["bqkv"], layers["wo"], layers["bo"],
                   layers["ln1_g"], layers["ln1_b"], layers["w1"], layers["b1"],
                   layers["w2"], layers["b2"], layers["ln2_g"], layers["ln2_b"])
    out_shape = jax.ShapeDtypeStruct((B, S, D), jnp.float32)

    if weights_resident:
        def wspec(*dims):
            n = len(dims)
            return pl.BlockSpec((L,) + dims, lambda b, _n=n: (0,) * (_n + 1))

        in_specs = [
            pl.BlockSpec((bt, S, D), lambda b: (b, 0, 0)),      # token embeddings
            pl.BlockSpec((S, D), lambda b: (0, 0)),             # positional embeddings
            pl.BlockSpec((1, D), lambda b: (0, 0)),             # embed LN gamma
            pl.BlockSpec((1, D), lambda b: (0, 0)),             # embed LN beta
            pl.BlockSpec((bt, 1, S), lambda b: (b, 0, 0)),      # additive key bias
            wspec(D, 3 * D), wspec(1, 3 * D),                   # Wqkv, bqkv
            wspec(D, D), wspec(1, D),                           # Wo, bo
            wspec(1, D), wspec(1, D),                           # LN1 gamma, beta
            wspec(D, F), wspec(1, F),                           # W1, b1
            wspec(F, D), wspec(1, D),                           # W2, b2
            wspec(1, D), wspec(1, D),                           # LN2 gamma, beta
        ]
        kernel = functools.partial(_resident_kernel, num_heads=num_heads, num_layers=L)
        call = pl.pallas_call(
            kernel, out_shape=out_shape, grid=(nb,),
            in_specs=in_specs,
            out_specs=pl.BlockSpec((bt, S, D), lambda b: (b, 0, 0)),
            compiler_params=pltpu.CompilerParams(
                dimension_semantics=("parallel",),
                vmem_limit_bytes=vmem_limit))
    else:
        def wspec(*dims):
            n = len(dims)
            return pl.BlockSpec((1,) + dims, lambda b, l, _n=n: (l,) + (0,) * _n)

        in_specs = [
            pl.BlockSpec((bt, S, D), lambda b, l: (b, 0, 0)),
            pl.BlockSpec((S, D), lambda b, l: (0, 0)),
            pl.BlockSpec((1, D), lambda b, l: (0, 0)),
            pl.BlockSpec((1, D), lambda b, l: (0, 0)),
            pl.BlockSpec((bt, 1, S), lambda b, l: (b, 0, 0)),
            wspec(D, 3 * D), wspec(1, 3 * D),
            wspec(D, D), wspec(1, D),
            wspec(1, D), wspec(1, D),
            wspec(D, F), wspec(1, F),
            wspec(F, D), wspec(1, D),
            wspec(1, D), wspec(1, D),
        ]
        kernel = functools.partial(_streaming_kernel, num_heads=num_heads)
        call = pl.pallas_call(
            kernel, out_shape=out_shape, grid=(nb, L),
            in_specs=in_specs,
            out_specs=pl.BlockSpec((bt, S, D), lambda b, l: (b, 0, 0)),
            scratch_shapes=[pltpu.VMEM((bt, S, D), jnp.float32)],  # f32 residual carry
            compiler_params=pltpu.CompilerParams(
                dimension_semantics=("parallel", "arbitrary"),
                vmem_limit_bytes=vmem_limit))

    return call(tok, pos, emb_g, emb_b, attn_bias, *weight_args)


# ------------------------------------------------------------------ model
def init_params(key, *, vocab, d_model, max_pos, ffn_dim, num_layers, pad_idx,
                std=0.02, param_dtype=jnp.bfloat16):
    ks = jax.random.split(key, 8)

    def nrm(k, shape, dtype):
        return (jax.random.normal(k, shape, jnp.float32) * std).astype(dtype)

    tok_emb = nrm(ks[0], (vocab, d_model), param_dtype).at[pad_idx].set(0)
    pos_emb = nrm(ks[1], (max_pos, d_model), param_dtype)
    emb_ln_g = jnp.ones((1, d_model), jnp.float32)
    emb_ln_b = jnp.zeros((1, d_model), jnp.float32)

    L, D, F = num_layers, d_model, ffn_dim
    # Q/K/V packed along the output (lane) axis once at init -> single wide-N matmul.
    wq = nrm(ks[2], (L, D, D), param_dtype)
    wk = nrm(ks[3], (L, D, D), param_dtype)
    wv = nrm(ks[4], (L, D, D), param_dtype)
    layers = dict(
        wqkv=jnp.concatenate([wq, wk, wv], axis=2),
        bqkv=jnp.zeros((L, 1, 3 * D), jnp.float32),
        wo=nrm(ks[5], (L, D, D), param_dtype), bo=jnp.zeros((L, 1, D), jnp.float32),
        ln1_g=jnp.ones((L, 1, D), jnp.float32), ln1_b=jnp.zeros((L, 1, D), jnp.float32),
        w1=nrm(ks[6], (L, D, F), param_dtype), b1=jnp.zeros((L, 1, F), jnp.float32),
        w2=nrm(ks[7], (L, F, D), param_dtype), b2=jnp.zeros((L, 1, D), jnp.float32),
        ln2_g=jnp.ones((L, 1, D), jnp.float32), ln2_b=jnp.zeros((L, 1, D), jnp.float32),
    )
    return dict(tok_emb=tok_emb, pos_emb=pos_emb,
                emb_ln_g=emb_ln_g, emb_ln_b=emb_ln_b, layers=layers)


def random_encoder_forward(params, input_ids, attention_mask, *, num_heads,
                           batch_block=None, weights_resident=None):
    B, S = input_ids.shape
    # Data-dependent vocab gather stays as plain-JAX glue feeding the kernel.
    tok = jnp.take(params["tok_emb"], input_ids, axis=0)              # (B, S, D)
    pos = params["pos_emb"][POS_OFFSET:POS_OFFSET + S]                # (S, D)
    # Precomputed additive key-padding bias: 0.0 attend / -1e9 pad.
    attn_bias = ((1.0 - attention_mask.astype(jnp.float32)) * -1e9).reshape(B, 1, S)
    return encoder_stack(tok, pos, params["emb_ln_g"], params["emb_ln_b"], attn_bias,
                         params["layers"], num_heads=num_heads,
                         batch_block=batch_block, weights_resident=weights_resident)


# ------------------------------------------------------------------ pure-JAX reference
def reference_forward(params, input_ids, attention_mask, *, num_heads):
    cdt = params["tok_emb"].dtype
    B, S = input_ids.shape
    tok = jnp.take(params["tok_emb"], input_ids, axis=0).astype(jnp.float32)
    pos = params["pos_emb"][POS_OFFSET:POS_OFFSET + S].astype(jnp.float32)
    x = _layernorm_f32(tok + pos, params["emb_ln_g"], params["emb_ln_b"])
    bias = ((1.0 - attention_mask.astype(jnp.float32)) * -1e9)[:, None, None, :]
    Ls = params["layers"]
    L, D = Ls["wqkv"].shape[0], Ls["wqkv"].shape[1]
    H, Dh = num_heads, D // num_heads
    scale = 1.0 / math.sqrt(Dh)
    for l in range(L):
        xc = x.astype(cdt)
        qkv = jnp.einsum("bsd,de->bse", xc, Ls["wqkv"][l],
                         preferred_element_type=jnp.float32) + Ls["bqkv"][l]
        q = (qkv[..., :D] * scale).astype(cdt).reshape(B, S, H, Dh).transpose(0, 2, 1, 3)
        k = qkv[..., D:2 * D].astype(cdt).reshape(B, S, H, Dh).transpose(0, 2, 1, 3)
        v = qkv[..., 2 * D:].astype(cdt).reshape(B, S, H, Dh).transpose(0, 2, 1, 3)
        sc = jnp.einsum("bhqd,bhkd->bhqk", q, k, preferred_element_type=jnp.float32) + bias
        p = jax.nn.softmax(sc, axis=-1)
        ctx = jnp.einsum("bhqk,bhkd->bhqd", p.astype(cdt), v,
                         preferred_element_type=jnp.float32)
        ctx = ctx.transpose(0, 2, 1, 3).reshape(B, S, D).astype(cdt)
        attn = jnp.einsum("bsd,de->bse", ctx, Ls["wo"][l],
                          preferred_element_type=jnp.float32) + Ls["bo"][l]
        y1 = _layernorm_f32(x + attn, Ls["ln1_g"][l], Ls["ln1_b"][l])
        ff = jnp.einsum("bsd,df->bsf", y1.astype(cdt), Ls["w1"][l],
                        preferred_element_type=jnp.float32) + Ls["b1"][l]
        ff = jax.nn.gelu(ff, approximate=True).astype(cdt)
        ff2 = jnp.einsum("bsf,fd->bsd", ff, Ls["w2"][l],
                         preferred_element_type=jnp.float32) + Ls["b2"][l]
        x = _layernorm_f32(y1 + ff2, Ls["ln2_g"][l], Ls["ln2_b"][l])
    return x


# ------------------------------------------------------------------ main
if __name__ == "__main__":
    VOCAB = 64          # src_vocab_size
    D_MODEL = 128       # d_model (multiple of 128 for lane density)
    MAX_POS = 64        # max_position_embeddings
    PAD_IDX = 1         # pad_idx
    N_LAYERS = 2
    N_HEADS = 4         # head_dim = 32
    FFN_DIM = 256
    B, S = 2, 8

    key = jax.random.PRNGKey(0)
    k_param, k_ids = jax.random.split(key)

    params = init_params(k_param, vocab=VOCAB, d_model=D_MODEL, max_pos=MAX_POS,
                         ffn_dim=FFN_DIM, num_layers=N_LAYERS, pad_idx=PAD_IDX)

    input_ids = jax.random.randint(k_ids, (B, S), 0, VOCAB, dtype=jnp.int32)
    attention_mask = jnp.ones((B, S), jnp.int32).at[1, -2:].set(0)   # pad tail of row 1
    input_ids = jnp.where(attention_mask == 0, PAD_IDX, input_ids)

    ref = reference_forward(params, input_ids, attention_mask, num_heads=N_HEADS)

    # Auto path (weights-resident for these tiny shapes).
    out = random_encoder_forward(params, input_ids, attention_mask, num_heads=N_HEADS)
    out = jax.block_until_ready(out)
    assert out.shape == (B, S, D_MODEL) and out.dtype == jnp.float32
    assert bool(jnp.all(jnp.isfinite(out)))
    assert bool(jnp.allclose(out, ref, atol=5e-2, rtol=5e-2))

    # Also exercise the layer-streaming variant (grid over layers, f32 scratch carry).
    out_s = random_encoder_forward(params, input_ids, attention_mask, num_heads=N_HEADS,
                                   weights_resident=False)
    out_s = jax.block_until_ready(out_s)
    assert bool(jnp.allclose(out_s, ref, atol=5e-2, rtol=5e-2))

    print("KERNEL_OK")
</pallas_src>

<mosaic_0001>
module attributes {stable_mosaic.version = 11 : i64} {
  func.func @_resident_kernel(%arg0: i32, %arg1: memref<1x8x128xbf16, #tpu.memory_space<vmem>>, %arg2: memref<8x128xbf16, #tpu.memory_space<vmem>>, %arg3: memref<1x128xf32, #tpu.memory_space<vmem>>, %arg4: memref<1x128xf32, #tpu.memory_space<vmem>>, %arg5: memref<1x1x8xf32, #tpu.memory_space<vmem>>, %arg6: memref<2x128x384xbf16, #tpu.memory_space<vmem>>, %arg7: memref<2x1x384xf32, #tpu.memory_space<vmem>>, %arg8: memref<2x128x128xbf16, #tpu.memory_space<vmem>>, %arg9: memref<2x1x128xf32, #tpu.memory_space<vmem>>, %arg10: memref<2x1x128xf32, #tpu.memory_space<vmem>>, %arg11: memref<2x1x128xf32, #tpu.memory_space<vmem>>, %arg12: memref<2x128x256xbf16, #tpu.memory_space<vmem>>, %arg13: memref<2x1x256xf32, #tpu.memory_space<vmem>>, %arg14: memref<2x256x128xbf16, #tpu.memory_space<vmem>>, %arg15: memref<2x1x128xf32, #tpu.memory_space<vmem>>, %arg16: memref<2x1x128xf32, #tpu.memory_space<vmem>>, %arg17: memref<2x1x128xf32, #tpu.memory_space<vmem>>, %arg18: memref<1x8x128xf32, #tpu.memory_space<vmem>>) attributes {dimension_semantics = [#tpu.dimension_semantics<parallel>], iteration_bounds = array<i64: 2>, scalar_prefetch = 0 : i64, scratch_operands = 0 : i64, tpu.core_type = #tpu.core_type<tc>, window_params = [{transform_indices = @transform_0, window_bounds = array<i64: 1, 8, 128>}, {pipeline_mode = #tpu.pipeline_mode<synchronous>, transform_indices = @transform_1, window_bounds = array<i64: 8, 128>}, {pipeline_mode = #tpu.pipeline_mode<synchronous>, transform_indices = @transform_2, window_bounds = array<i64: 1, 128>}, {pipeline_mode = #tpu.pipeline_mode<synchronous>, transform_indices = @transform_3, window_bounds = array<i64: 1, 128>}, {transform_indices = @transform_4, window_bounds = array<i64: 1, 1, 8>}, {pipeline_mode = #tpu.pipeline_mode<synchronous>, transform_indices = @transform_5, window_bounds = array<i64: 2, 128, 384>}, {pipeline_mode = #tpu.pipeline_mode<synchronous>, transform_indices = @transform_6, window_bounds = array<i64: 2, 1, 384>}, {pipeline_mode = #tpu.pipeline_mode<synchronous>, transform_indices = @transform_7, window_bounds = array<i64: 2, 128, 128>}, {pipeline_mode = #tpu.pipeline_mode<synchronous>, transform_indices = @transform_8, window_bounds = array<i64: 2, 1, 128>}, {pipeline_mode = #tpu.pipeline_mode<synchronous>, transform_indices = @transform_9, window_bounds = array<i64: 2, 1, 128>}, {pipeline_mode = #tpu.pipeline_mode<synchronous>, transform_indices = @transform_10, window_bounds = array<i64: 2, 1, 128>}, {pipeline_mode = #tpu.pipeline_mode<synchronous>, transform_indices = @transform_11, window_bounds = array<i64: 2, 128, 256>}, {pipeline_mode = #tpu.pipeline_mode<synchronous>, transform_indices = @transform_12, window_bounds = array<i64: 2, 1, 256>}, {pipeline_mode = #tpu.pipeline_mode<synchronous>, transform_indices = @transform_13, window_bounds = array<i64: 2, 256, 128>}, {pipeline_mode = #tpu.pipeline_mode<synchronous>, transform_indices = @transform_14, window_bounds = array<i64: 2, 1, 128>}, {pipeline_mode = #tpu.pipeline_mode<synchronous>, transform_indices = @transform_15, window_bounds = array<i64: 2, 1, 128>}, {pipeline_mode = #tpu.pipeline_mode<synchronous>, transform_indices = @transform_16, window_bounds = array<i64: 2, 1, 128>}, {transform_indices = @transform_17, window_bounds = array<i64: 1, 8, 128>}]} {
    %c0 = arith.constant 0 : index
    %c0_0 = arith.constant 0 : index
    %c0_1 = arith.constant 0 : index
    %0 = vector.load %arg1[%c0, %c0_0, %c0_1] : memref<1x8x128xbf16, #tpu.memory_space<vmem>>, vector<1x8x128xbf16>
    %1 = arith.extf %0 : vector<1x8x128xbf16> to vector<1x8x128xf32>
    %c0_2 = arith.constant 0 : index
    %c0_3 = arith.constant 0 : index
    %2 = vector.load %arg2[%c0_2, %c0_3] : memref<8x128xbf16, #tpu.memory_space<vmem>>, vector<8x128xbf16>
    %3 = arith.extf %2 : vector<8x128xbf16> to vector<8x128xf32>
    %4 = vector.shape_cast %3 : vector<8x128xf32> to vector<1x8x128xf32>
    %5 = arith.addf %1, %4 : vector<1x8x128xf32>
    %c0_4 = arith.constant 0 : index
    %c0_5 = arith.constant 0 : index
    %6 = vector.load %arg3[%c0_4, %c0_5] : memref<1x128xf32, #tpu.memory_space<vmem>>, vector<1x128xf32>
    %c0_6 = arith.constant 0 : index
    %c0_7 = arith.constant 0 : index
    %7 = vector.load %arg4[%c0_6, %c0_7] : memref<1x128xf32, #tpu.memory_space<vmem>>, vector<1x128xf32>
    %cst = arith.constant dense<0.000000e+00> : vector<1x8xf32>
    %8 = vector.multi_reduction <add>, %5, %cst [2] : vector<1x8x128xf32> to vector<1x8xf32>
    %9 = vector.shape_cast %8 : vector<1x8xf32> to vector<1x8x1xf32>
    %cst_8 = arith.constant 1.280000e+02 : f32
    %10 = vector.broadcast %cst_8 : f32 to vector<1x8x1xf32>
    %11 = arith.divf %9, %10 : vector<1x8x1xf32>
    %12 = vector.broadcast %11 : vector<1x8x1xf32> to vector<1x8x128xf32>
    %13 = arith.subf %5, %12 : vector<1x8x128xf32>
    %14 = arith.mulf %13, %13 : vector<1x8x128xf32>
    %cst_9 = arith.constant dense<0.000000e+00> : vector<1x8xf32>
    %15 = vector.multi_reduction <add>, %14, %cst_9 [2] : vector<1x8x128xf32> to vector<1x8xf32>
    %16 = vector.shape_cast %15 : vector<1x8xf32> to vector<1x8x1xf32>
    %cst_10 = arith.constant 1.280000e+02 : f32
    %17 = vector.broadcast %cst_10 : f32 to vector<1x8x1xf32>
    %18 = arith.divf %16, %17 : vector<1x8x1xf32>
    %19 = vector.broadcast %11 : vector<1x8x1xf32> to vector<1x8x128xf32>
    %20 = arith.subf %5, %19 : vector<1x8x128xf32>
    %cst_11 = arith.constant 9.99999974E-6 : f32
    %21 = vector.broadcast %cst_11 : f32 to vector<1x8x1xf32>
    %22 = arith.addf %18, %21 : vector<1x8x1xf32>
    %23 = math.rsqrt %22 : vector<1x8x1xf32>
    %24 = vector.broadcast %23 : vector<1x8x1xf32> to vector<1x8x128xf32>
    %25 = arith.mulf %20, %24 : vector<1x8x128xf32>
    %26 = vector.shape_cast %6 : vector<1x128xf32> to vector<1x1x128xf32>
    %27 = vector.broadcast %26 : vector<1x1x128xf32> to vector<1x8x128xf32>
    %28 = arith.mulf %25, %27 : vector<1x8x128xf32>
    %29 = vector.shape_cast %7 : vector<1x128xf32> to vector<1x1x128xf32>
    %30 = vector.broadcast %29 : vector<1x1x128xf32> to vector<1x8x128xf32>
    %31 = arith.addf %28, %30 : vector<1x8x128xf32>
    %32 = vector.shape_cast %31 : vector<1x8x128xf32> to vector<8x128xf32>
    %c0_12 = arith.constant 0 : index
    %c0_13 = arith.constant 0 : index
    %c0_14 = arith.constant 0 : index
    %33 = vector.load %arg5[%c0_12, %c0_13, %c0_14] : memref<1x1x8xf32, #tpu.memory_space<vmem>>, vector<1x1x8xf32>
    %34 = vector.shape_cast %33 : vector<1x1x8xf32> to vector<1x1x1x8xf32>
    %35 = vector.shape_cast %34 : vector<1x1x1x8xf32> to vector<1x1x1x8xf32>
    %36 = vector.broadcast %35 : vector<1x1x1x8xf32> to vector<1x4x1x8xf32>
    %37 = vector.shape_cast %36 : vector<1x4x1x8xf32> to vector<4x1x8xf32>
    %c0_i32 = arith.constant 0 : i32
    %c2_i32 = arith.constant 2 : i32
    %38 = arith.addi %c0_i32, %c2_i32 : i32
    %c1_i32 = arith.constant 1 : i32
    %39 = scf.for %arg19 = %c0_i32 to %38 step %c1_i32 iter_args(%arg20 = %32) -> (vector<8x128xf32>)  : i32 {
      %42 = arith.index_cast %arg19 : i32 to index
      %c0_19 = arith.constant 0 : index
      %c0_20 = arith.constant 0 : index
      %43 = vector.load %arg6[%42, %c0_19, %c0_20] : memref<2x128x384xbf16, #tpu.memory_space<vmem>>, vector<1x128x384xbf16>
      %44 = vector.shape_cast %43 : vector<1x128x384xbf16> to vector<128x384xbf16>
      %45 = arith.index_cast %arg19 : i32 to index
      %c0_21 = arith.constant 0 : index
      %c0_22 = arith.constant 0 : index
      %46 = vector.load %arg7[%45, %c0_21, %c0_22] : memref<2x1x384xf32, #tpu.memory_space<vmem>>, vector<1x1x384xf32>
      %47 = vector.shape_cast %46 : vector<1x1x384xf32> to vector<1x384xf32>
      %48 = arith.index_cast %arg19 : i32 to index
      %c0_23 = arith.constant 0 : index
      %c0_24 = arith.constant 0 : index
      %49 = vector.load %arg8[%48, %c0_23, %c0_24] : memref<2x128x128xbf16, #tpu.memory_space<vmem>>, vector<1x128x128xbf16>
      %50 = vector.shape_cast %49 : vector<1x128x128xbf16> to vector<128x128xbf16>
      %51 = arith.index_cast %arg19 : i32 to index
      %c0_25 = arith.constant 0 : index
      %c0_26 = arith.constant 0 : index
      %52 = vector.load %arg9[%51, %c0_25, %c0_26] : memref<2x1x128xf32, #tpu.memory_space<vmem>>, vector<1x1x128xf32>
      %53 = vector.shape_cast %52 : vector<1x1x128xf32> to vector<1x128xf32>
      %54 = arith.index_cast %arg19 : i32 to index
      %c0_27 = arith.constant 0 : index
      %c0_28 = arith.constant 0 : index
      %55 = vector.load %arg10[%54, %c0_27, %c0_28] : memref<2x1x128xf32, #tpu.memory_space<vmem>>, vector<1x1x128xf32>
      %56 = vector.shape_cast %55 : vector<1x1x128xf32> to vector<1x128xf32>
      %57 = arith.index_cast %arg19 : i32 to index
      %c0_29 = arith.constant 0 : index
      %c0_30 = arith.constant 0 : index
      %58 = vector.load %arg11[%57, %c0_29, %c0_30] : memref<2x1x128xf32, #tpu.memory_space<vmem>>, vector<1x1x128xf32>
      %59 = vector.shape_cast %58 : vector<1x1x128xf32> to vector<1x128xf32>
      %60 = arith.index_cast %arg19 : i32 to index
      %c0_31 = arith.constant 0 : index
      %c0_32 = arith.constant 0 : index
      %61 = vector.load %arg12[%60, %c0_31, %c0_32] : memref<2x128x256xbf16, #tpu.memory_space<vmem>>, vector<1x128x256xbf16>
      %62 = vector.shape_cast %61 : vector<1x128x256xbf16> to vector<128x256xbf16>
      %63 = arith.index_cast %arg19 : i32 to index
      %c0_33 = arith.constant 0 : index
      %c0_34 = arith.constant 0 : index
      %64 = vector.load %arg13[%63, %c0_33, %c0_34] : memref<2x1x256xf32, #tpu.memory_space<vmem>>, vector<1x1x256xf32>
      %65 = vector.shape_cast %64 : vector<1x1x256xf32> to vector<1x256xf32>
      %66 = arith.index_cast %arg19 : i32 to index
      %c0_35 = arith.constant 0 : index
      %c0_36 = arith.constant 0 : index
      %67 = vector.load %arg14[%66, %c0_35, %c0_36] : memref<2x256x128xbf16, #tpu.memory_space<vmem>>, vector<1x256x128xbf16>
      %68 = vector.shape_cast %67 : vector<1x256x128xbf16> to vector<256x128xbf16>
      %69 = arith.index_cast %arg19 : i32 to index
      %c0_37 = arith.constant 0 : index
      %c0_38 = arith.constant 0 : index
      %70 = vector.load %arg15[%69, %c0_37, %c0_38] : memref<2x1x128xf32, #tpu.memory_space<vmem>>, vector<1x1x128xf32>
      %71 = vector.shape_cast %70 : vector<1x1x128xf32> to vector<1x128xf32>
      %72 = arith.index_cast %arg19 : i32 to index
      %c0_39 = arith.constant 0 : index
      %c0_40 = arith.constant 0 : index
      %73 = vector.load %arg16[%72, %c0_39, %c0_40] : memref<2x1x128xf32, #tpu.memory_space<vmem>>, vector<1x1x128xf32>
      %74 = vector.shape_cast %73 : vector<1x1x128xf32> to vector<1x128xf32>
      %75 = arith.index_cast %arg19 : i32 to index
      %c0_41 = arith.constant 0 : index
      %c0_42 = arith.constant 0 : index
      %76 = vector.load %arg17[%75, %c0_41, %c0_42] : memref<2x1x128xf32, #tpu.memory_space<vmem>>, vector<1x1x128xf32>
      %77 = vector.shape_cast %76 : vector<1x1x128xf32> to vector<1x128xf32>
      %78 = arith.truncf %arg20 : vector<8x128xf32> to vector<8x128xbf16>
      %cst_43 = arith.constant dense<0.000000e+00> : vector<8x384xf32>
      %79 = tpu.matmul %78, %44, %cst_43 {dimension_numbers = #tpu.dot_dimension_numbers<[1], [0], [0], [1], [0, 0, 1, 1], [], []>} : vector<8x128xbf16>, vector<128x384xbf16>, vector<8x384xf32> -> vector<8x384xf32>
      %80 = vector.broadcast %47 : vector<1x384xf32> to vector<8x384xf32>
      %81 = arith.addf %79, %80 : vector<8x384xf32>
      %82 = vector.extract_strided_slice %81 {offsets = [0, 0], sizes = [8, 128], strides = [1, 1]} : vector<8x384xf32> to vector<8x128xf32>
      %cst_44 = arith.constant 0.176776692 : f32
      %83 = vector.broadcast %cst_44 : f32 to vector<8x128xf32>
      %84 = arith.mulf %82, %83 : vector<8x128xf32>
      %85 = arith.truncf %84 : vector<8x128xf32> to vector<8x128xbf16>
      %86 = vector.extract_strided_slice %81 {offsets = [0, 128], sizes = [8, 128], strides = [1, 1]} : vector<8x384xf32> to vector<8x128xf32>
      %87 = arith.truncf %86 : vector<8x128xf32> to vector<8x128xbf16>
      %88 = vector.extract_strided_slice %81 {offsets = [0, 256], sizes = [8, 128], strides = [1, 1]} : vector<8x384xf32> to vector<8x128xf32>
      %89 = arith.truncf %88 : vector<8x128xf32> to vector<8x128xbf16>
      %90 = vector.shape_cast %85 : vector<8x128xbf16> to vector<1x8x4x32xbf16>
      %91 = tpu.transpose %90, [0, 2, 1, 3] : vector<1x8x4x32xbf16> -> vector<1x4x8x32xbf16>
      %92 = vector.shape_cast %91 : vector<1x4x8x32xbf16> to vector<4x8x32xbf16>
      %93 = vector.shape_cast %87 : vector<8x128xbf16> to vector<1x8x4x32xbf16>
      %94 = tpu.transpose %93, [0, 2, 1, 3] : vector<1x8x4x32xbf16> -> vector<1x4x8x32xbf16>
      %95 = vector.shape_cast %94 : vector<1x4x8x32xbf16> to vector<4x8x32xbf16>
      %96 = vector.shape_cast %89 : vector<8x128xbf16> to vector<1x8x4x32xbf16>
      %97 = tpu.transpose %96, [0, 2, 1, 3] : vector<1x8x4x32xbf16> -> vector<1x4x8x32xbf16>
      %98 = vector.shape_cast %97 : vector<1x4x8x32xbf16> to vector<4x8x32xbf16>
      "tpu.trace_start"() <{level = 10 : i32, message = "bqd,bkd->bqk"}> : () -> ()
      %cst_45 = arith.constant dense<0.000000e+00> : vector<4x8x8xf32>
      %99 = tpu.matmul %92, %95, %cst_45 {dimension_numbers = #tpu.dot_dimension_numbers<[2], [2], [1], [1], [0, 0, 0, 1, 1, 1], [0], [0]>} : vector<4x8x32xbf16>, vector<4x8x32xbf16>, vector<4x8x8xf32> -> vector<4x8x8xf32>
      "tpu.trace_stop"() : () -> ()
      %100 = vector.broadcast %37 : vector<4x1x8xf32> to vector<4x8x8xf32>
      %101 = arith.addf %99, %100 : vector<4x8x8xf32>
      %cst_46 = arith.constant dense<0xFF800000> : vector<4x8xf32>
      %102 = vector.multi_reduction <maximumf>, %101, %cst_46 [2] : vector<4x8x8xf32> to vector<4x8xf32>
      %103 = vector.shape_cast %102 : vector<4x8xf32> to vector<4x8x1xf32>
      %104 = vector.broadcast %103 : vector<4x8x1xf32> to vector<4x8x8xf32>
      %105 = arith.subf %101, %104 : vector<4x8x8xf32>
      %106 = math.exp %105 : vector<4x8x8xf32>
      %cst_47 = arith.constant dense<0.000000e+00> : vector<4x8xf32>
      %107 = vector.multi_reduction <add>, %106, %cst_47 [2] : vector<4x8x8xf32> to vector<4x8xf32>
      %108 = vector.shape_cast %107 : vector<4x8xf32> to vector<4x8x1xf32>
      %109 = tpu.reciprocal %108 {approx = true} : vector<4x8x1xf32> -> vector<4x8x1xf32>
      %110 = vector.broadcast %109 : vector<4x8x1xf32> to vector<4x8x8xf32>
      %111 = arith.mulf %106, %110 : vector<4x8x8xf32>
      %112 = arith.truncf %111 : vector<4x8x8xf32> to vector<4x8x8xbf16>
      "tpu.trace_start"() <{level = 10 : i32, message = "bqk,bkd->bqd"}> : () -> ()
      %cst_48 = arith.constant dense<0.000000e+00> : vector<4x8x32xf32>
      %113 = tpu.matmul %112, %98, %cst_48 {dimension_numbers = #tpu.dot_dimension_numbers<[2], [1], [1], [2], [0, 0, 0, 1, 1, 2], [0], [0]>} : vector<4x8x8xbf16>, vector<4x8x32xbf16>, vector<4x8x32xf32> -> vector<4x8x32xf32>
      "tpu.trace_stop"() : () -> ()
      %114 = arith.truncf %113 : vector<4x8x32xf32> to vector<4x8x32xbf16>
      %115 = vector.shape_cast %114 : vector<4x8x32xbf16> to vector<1x4x8x32xbf16>
      %116 = tpu.transpose %115, [0, 2, 1, 3] : vector<1x4x8x32xbf16> -> vector<1x8x4x32xbf16>
      %117 = vector.shape_cast %116 : vector<1x8x4x32xbf16> to vector<8x128xbf16>
      %cst_49 = arith.constant dense<0.000000e+00> : vector<8x128xf32>
      %118 = tpu.matmul %117, %50, %cst_49 {dimension_numbers = #tpu.dot_dimension_numbers<[1], [0], [0], [1], [0, 0, 1, 1], [], []>} : vector<8x128xbf16>, vector<128x128xbf16>, vector<8x128xf32> -> vector<8x128xf32>
      %119 = vector.broadcast %53 : vector<1x128xf32> to vector<8x128xf32>
      %120 = arith.addf %118, %119 : vector<8x128xf32>
      %121 = arith.addf %arg20, %120 : vector<8x128xf32>
      %cst_50 = arith.constant dense<0.000000e+00> : vector<8xf32>
      %122 = vector.multi_reduction <add>, %121, %cst_50 [1] : vector<8x128xf32> to vector<8xf32>
      %123 = vector.shape_cast %122 : vector<8xf32> to vector<8x1xf32>
      %cst_51 = arith.constant 1.280000e+02 : f32
      %124 = vector.broadcast %cst_51 : f32 to vector<8x1xf32>
      %125 = arith.divf %123, %124 : vector<8x1xf32>
      %126 = vector.broadcast %125 : vector<8x1xf32> to vector<8x128xf32>
      %127 = arith.subf %121, %126 : vector<8x128xf32>
      %128 = arith.mulf %127, %127 : vector<8x128xf32>
      %cst_52 = arith.constant dense<0.000000e+00> : vector<8xf32>
      %129 = vector.multi_reduction <add>, %128, %cst_52 [1] : vector<8x128xf32> to vector<8xf32>
      %130 = vector.shape_cast %129 : vector<8xf32> to vector<8x1xf32>
      %cst_53 = arith.constant 1.280000e+02 : f32
      %131 = vector.broadcast %cst_53 : f32 to vector<8x1xf32>
      %132 = arith.divf %130, %131 : vector<8x1xf32>
      %133 = vector.broadcast %125 : vector<8x1xf32> to vector<8x128xf32>
      %134 = arith.subf %121, %133 : vector<8x128xf32>
      %cst_54 = arith.constant 9.99999974E-6 : f32
      %135 = vector.broadcast %cst_54 : f32 to vector<8x1xf32>
      %136 = arith.addf %132, %135 : vector<8x1xf32>
      %137 = math.rsqrt %136 : vector<8x1xf32>
      %138 = vector.broadcast %137 : vector<8x1xf32> to vector<8x128xf32>
      %139 = arith.mulf %134, %138 : vector<8x128xf32>
      %140 = vector.broadcast %56 : vector<1x128xf32> to vector<8x128xf32>
      %141 = arith.mulf %139, %140 : vector<8x128xf32>
      %142 = vector.broadcast %59 : vector<1x128xf32> to vector<8x128xf32>
      %143 = arith.addf %141, %142 : vector<8x128xf32>
      %144 = arith.truncf %143 : vector<8x128xf32> to vector<8x128xbf16>
      %cst_55 = arith.constant dense<0.000000e+00> : vector<8x256xf32>
      %145 = tpu.matmul %144, %62, %cst_55 {dimension_numbers = #tpu.dot_dimension_numbers<[1], [0], [0], [1], [0, 0, 1, 1], [], []>} : vector<8x128xbf16>, vector<128x256xbf16>, vector<8x256xf32> -> vector<8x256xf32>
      %146 = vector.broadcast %65 : vector<1x256xf32> to vector<8x256xf32>
      %147 = arith.addf %145, %146 : vector<8x256xf32>
      %148 = arith.mulf %147, %147 : vector<8x256xf32>
      %149 = arith.mulf %147, %148 : vector<8x256xf32>
      %cst_56 = arith.constant 4.471500e-02 : f32
      %150 = vector.broadcast %cst_56 : f32 to vector<8x256xf32>
      %151 = arith.mulf %150, %149 : vector<8x256xf32>
      %152 = arith.addf %147, %151 : vector<8x256xf32>
      %cst_57 = arith.constant 0.797884583 : f32
      %153 = vector.broadcast %cst_57 : f32 to vector<8x256xf32>
      %154 = arith.mulf %153, %152 : vector<8x256xf32>
      %155 = math.tanh %154 : vector<8x256xf32>
      %cst_58 = arith.constant 1.000000e+00 : f32
      %156 = vector.broadcast %cst_58 : f32 to vector<8x256xf32>
      %157 = arith.addf %156, %155 : vector<8x256xf32>
      %cst_59 = arith.constant 5.000000e-01 : f32
      %158 = vector.broadcast %cst_59 : f32 to vector<8x256xf32>
      %159 = arith.mulf %158, %157 : vector<8x256xf32>
      %160 = arith.mulf %147, %159 : vector<8x256xf32>
      %161 = arith.truncf %160 : vector<8x256xf32> to vector<8x256xbf16>
      %cst_60 = arith.constant dense<0.000000e+00> : vector<8x128xf32>
      %162 = tpu.matmul %161, %68, %cst_60 {dimension_numbers = #tpu.dot_dimension_numbers<[1], [0], [0], [1], [0, 0, 1, 1], [], []>} : vector<8x256xbf16>, vector<256x128xbf16>, vector<8x128xf32> -> vector<8x128xf32>
      %163 = vector.broadcast %71 : vector<1x128xf32> to vector<8x128xf32>
      %164 = arith.addf %162, %163 : vector<8x128xf32>
      %165 = arith.addf %143, %164 : vector<8x128xf32>
      %cst_61 = arith.constant dense<0.000000e+00> : vector<8xf32>
      %166 = vector.multi_reduction <add>, %165, %cst_61 [1] : vector<8x128xf32> to vector<8xf32>
      %167 = vector.shape_cast %166 : vector<8xf32> to vector<8x1xf32>
      %cst_62 = arith.constant 1.280000e+02 : f32
      %168 = vector.broadcast %cst_62 : f32 to vector<8x1xf32>
      %169 = arith.divf %167, %168 : vector<8x1xf32>
      %170 = vector.broadcast %169 : vector<8x1xf32> to vector<8x128xf32>
      %171 = arith.subf %165, %170 : vector<8x128xf32>
      %172 = arith.mulf %171, %171 : vector<8x128xf32>
      %cst_63 = arith.constant dense<0.000000e+00> : vector<8xf32>
      %173 = vector.multi_reduction <add>, %172, %cst_63 [1] : vector<8x128xf32> to vector<8xf32>
      %174 = vector.shape_cast %173 : vector<8xf32> to vector<8x1xf32>
      %cst_64 = arith.constant 1.280000e+02 : f32
      %175 = vector.broadcast %cst_64 : f32 to vector<8x1xf32>
      %176 = arith.divf %174, %175 : vector<8x1xf32>
      %177 = vector.broadcast %169 : vector<8x1xf32> to vector<8x128xf32>
      %178 = arith.subf %165, %177 : vector<8x128xf32>
      %cst_65 = arith.constant 9.99999974E-6 : f32
      %179 = vector.broadcast %cst_65 : f32 to vector<8x1xf32>
      %180 = arith.addf %176, %179 : vector<8x1xf32>
      %181 = math.rsqrt %180 : vector<8x1xf32>
      %182 = vector.broadcast %181 : vector<8x1xf32> to vector<8x128xf32>
      %183 = arith.mulf %178, %182 : vector<8x128xf32>
      %184 = vector.broadcast %74 : vector<1x128xf32> to vector<8x128xf32>
      %185 = arith.mulf %183, %184 : vector<8x128xf32>
      %186 = vector.broadcast %77 : vector<1x128xf32> to vector<8x128xf32>
      %187 = arith.addf %185, %186 : vector<8x128xf32>
      scf.yield %187 : vector<8x128xf32>
    }
    %c2_i32_15 = arith.constant 2 : i32
    %40 = vector.shape_cast %39 : vector<8x128xf32> to vector<1x8x128xf32>
    %c0_16 = arith.constant 0 : index
    %c0_17 = arith.constant 0 : index
    %c0_18 = arith.constant 0 : index
    %41 = vector.load %arg18[%c0_16, %c0_17, %c0_18] : memref<1x8x128xf32, #tpu.memory_space<vmem>>, vector<1x8x128xf32>
    tpu.vector_store %arg18[%c0_16, %c0_17, %c0_18], %40 {strides = array<i32>} : memref<1x8x128xf32, #tpu.memory_space<vmem>>, vector<1x8x128xf32>,
    return
  }
  func.func @transform_0(%arg0: i32) -> (i32, i32, i32) {
    %c0_i32 = arith.constant 0 : i32
    %c0_i32_0 = arith.constant 0 : i32
    %c0_i32_1 = arith.constant 0 : i32
    return %arg0, %c0_i32, %c0_i32_0 : i32, i32, i32
  }
  func.func @transform_1(%arg0: i32) -> (i32, i32) {
    %c0_i32 = arith.constant 0 : i32
    %c0_i32_0 = arith.constant 0 : i32
    %c0_i32_1 = arith.constant 0 : i32
    return %c0_i32, %c0_i32_0 : i32, i32
  }
  func.func @transform_2(%arg0: i32) -> (i32, i32) {
    %c0_i32 = arith.constant 0 : i32
    %c0_i32_0 = arith.constant 0 : i32
    %c0_i32_1 = arith.constant 0 : i32
    return %c0_i32, %c0_i32_0 : i32, i32
  }
  func.func @transform_3(%arg0: i32) -> (i32, i32) {
    %c0_i32 = arith.constant 0 : i32
    %c0_i32_0 = arith.constant 0 : i32
    %c0_i32_1 = arith.constant 0 : i32
    return %c0_i32, %c0_i32_0 : i32, i32
  }
  func.func @transform_4(%arg0: i32) -> (i32, i32, i32) {
    %c0_i32 = arith.constant 0 : i32
    %c0_i32_0 = arith.constant 0 : i32
    %c0_i32_1 = arith.constant 0 : i32
    return %arg0, %c0_i32, %c0_i32_0 : i32, i32, i32
  }
  func.func @transform_5(%arg0: i32) -> (i32, i32, i32) {
    %c0_i32 = arith.constant 0 : i32
    %c0_i32_0 = arith.constant 0 : i32
    %c0_i32_1 = arith.constant 0 : i32
    %c0_i32_2 = arith.constant 0 : i32
    return %c0_i32, %c0_i32_0, %c0_i32_1 : i32, i32, i32
  }
  func.func @transform_6(%arg0: i32) -> (i32, i32, i32) {
    %c0_i32 = arith.constant 0 : i32
    %c0_i32_0 = arith.constant 0 : i32
    %c0_i32_1 = arith.constant 0 : i32
    %c0_i32_2 = arith.constant 0 : i32
    return %c0_i32, %c0_i32_0, %c0_i32_1 : i32, i32, i32
  }
  func.func @transform_7(%arg0: i32) -> (i32, i32, i32) {
    %c0_i32 = arith.constant 0 : i32
    %c0_i32_0 = arith.constant 0 : i32
    %c0_i32_1 = arith.constant 0 : i32
    %c0_i32_2 = arith.constant 0 : i32
    return %c0_i32, %c0_i32_0, %c0_i32_1 : i32, i32, i32
  }
  func.func @transform_8(%arg0: i32) -> (i32, i32, i32) {
    %c0_i32 = arith.constant 0 : i32
    %c0_i32_0 = arith.constant 0 : i32
    %c0_i32_1 = arith.constant 0 : i32
    %c0_i32_2 = arith.constant 0 : i32
    return %c0_i32, %c0_i32_0, %c0_i32_1 : i32, i32, i32
  }
  func.func @transform_9(%arg0: i32) -> (i32, i32, i32) {
    %c0_i32 = arith.constant 0 : i32
    %c0_i32_0 = arith.constant 0 : i32
    %c0_i32_1 = arith.constant 0 : i32
    %c0_i32_2 = arith.constant 0 : i32
    return %c0_i32, %c0_i32_0, %c0_i32_1 : i32, i32, i32
  }
  func.func @transform_10(%arg0: i32) -> (i32, i32, i32) {
    %c0_i32 = arith.constant 0 : i32
    %c0_i32_0 = arith.constant 0 : i32
    %c0_i32_1 = arith.constant 0 : i32
    %c0_i32_2 = arith.constant 0 : i32
    return %c0_i32, %c0_i32_0, %c0_i32_1 : i32, i32, i32
  }
  func.func @transform_11(%arg0: i32) -> (i32, i32, i32) {
    %c0_i32 = arith.constant 0 : i32
    %c0_i32_0 = arith.constant 0 : i32
    %c0_i32_1 = arith.constant 0 : i32
    %c0_i32_2 = arith.constant 0 : i32
    return %c0_i32, %c0_i32_0, %c0_i32_1 : i32, i32, i32
  }
  func.func @transform_12(%arg0: i32) -> (i32, i32, i32) {
    %c0_i32 = arith.constant 0 : i32
    %c0_i32_0 = arith.constant 0 : i32
    %c0_i32_1 = arith.constant 0 : i32
    %c0_i32_2 = arith.constant 0 : i32
    return %c0_i32, %c0_i32_0, %c0_i32_1 : i32, i32, i32
  }
  func.func @transform_13(%arg0: i32) -> (i32, i32, i32) {
    %c0_i32 = arith.constant 0 : i32
    %c0_i32_0 = arith.constant 0 : i32
    %c0_i32_1 = arith.constant 0 : i32
    %c0_i32_2 = arith.constant 0 : i32
    return %c0_i32, %c0_i32_0, %c0_i32_1 : i32, i32, i32
  }
  func.func @transform_14(%arg0: i32) -> (i32, i32, i32) {
    %c0_i32 = arith.constant 0 : i32
    %c0_i32_0 = arith.constant 0 : i32
    %c0_i32_1 = arith.constant 0 : i32
    %c0_i32_2 = arith.constant 0 : i32
    return %c0_i32, %c0_i32_0, %c0_i32_1 : i32, i32, i32
  }
  func.func @transform_15(%arg0: i32) -> (i32, i32, i32) {
    %c0_i32 = arith.constant 0 : i32
    %c0_i32_0 = arith.constant 0 : i32
    %c0_i32_1 = arith.constant 0 : i32
    %c0_i32_2 = arith.constant 0 : i32
    return %c0_i32, %c0_i32_0, %c0_i32_1 : i32, i32, i32
  }
  func.func @transform_16(%arg0: i32) -> (i32, i32, i32) {
    %c0_i32 = arith.constant 0 : i32
    %c0_i32_0 = arith.constant 0 : i32
    %c0_i32_1 = arith.constant 0 : i32
    %c0_i32_2 = arith.constant 0 : i32
    return %c0_i32, %c0_i32_0, %c0_i32_1 : i32, i32, i32
  }
  func.func @transform_17(%arg0: i32) -> (i32, i32, i32) {
    %c0_i32 = arith.constant 0 : i32
    %c0_i32_0 = arith.constant 0 : i32
    %c0_i32_1 = arith.constant 0 : i32
    return %arg0, %c0_i32, %c0_i32_0 : i32, i32, i32
  }
}

</mosaic_0001>

<llo_original>
// kernel: tpu_custom_call.1
$region0: #{tpu_custom_call.1}
  #allocation0 [shape = 'u32[]', space=smem, size = 0x4, offset = 0x4, fixed_abs, tag = 'smem constant byte address 0x4 - core index']
  #allocation1 [shape = 'u32[72,128]{1,0:T(1,128)}', space=vmem, size = 0x9000, scoped, tag = 'internal scratch']
  %s0 = inlined_call_operand.hbm [shape: bf16[2,8,128], index: 0, kind: input, shape index: {}]
  %s1 = inlined_call_operand.hbm [shape: bf16[8,128], index: 1, kind: input, shape index: {}]
  %s2 = inlined_call_operand.hbm [shape: f32[1,128], index: 2, kind: input, shape index: {}]
  %s3 = inlined_call_operand.hbm [shape: f32[1,128], index: 3, kind: input, shape index: {}]
  %s4 = inlined_call_operand.vmem [shape: f32[2,1,8], index: 4, kind: input, shape index: {}]
  %s5 = inlined_call_operand.hbm [shape: bf16[2,128,384], index: 5, kind: input, shape index: {}]
  %s6 = inlined_call_operand.hbm [shape: f32[2,1,384], index: 6, kind: input, shape index: {}]
  %s7 = inlined_call_operand.hbm [shape: bf16[2,128,128], index: 7, kind: input, shape index: {}]
  %s8 = inlined_call_operand.hbm [shape: f32[2,1,128], index: 8, kind: input, shape index: {}]
  %s9 = inlined_call_operand.vmem [shape: f32[2,1,128], index: 9, kind: input, shape index: {}]
  %s10 = inlined_call_operand.hbm [shape: f32[2,1,128], index: 10, kind: input, shape index: {}]
  %s11 = inlined_call_operand.hbm [shape: bf16[2,128,256], index: 11, kind: input, shape index: {}]
  %s12 = inlined_call_operand.vmem [shape: f32[2,1,256], index: 12, kind: input, shape index: {}]
  %s13 = inlined_call_operand.hbm [shape: bf16[2,256,128], index: 13, kind: input, shape index: {}]
  %s14 = inlined_call_operand.vmem [shape: f32[2,1,128], index: 14, kind: input, shape index: {}]
  %s15 = inlined_call_operand.vmem [shape: f32[2,1,128], index: 15, kind: input, shape index: {}]
  %s16 = inlined_call_operand.vmem [shape: f32[2,1,128], index: 16, kind: input, shape index: {}]
  %s17 = inlined_call_operand.hbm [shape: f32[2,8,128], index: 17, kind: output, shape index: {}]
  %s18 = sld [smem:[#allocation0]]
  $region152: #{tpu_custom_call.1} parent=0
    _
  %s20 = ssub.s32 1, %s18
  %s21 = scalar_select 0, %s20, %s18
  $region1: #{tpu_custom_call.1} parent=0
    #allocation2 [shape = 'u8[4096]{0}', space=vmem, size = 0x1000, scoped, tag = 'input window, operand 0']
    #allocation3 [shape = 's32[2]{0}', space=sflag, size = 0x8, scoped, tag = 'scoped memory for tpu_custom_call.1']
    #allocation4 [shape = 's32[2]{0}', space=sflag, size = 0x8, scoped, tag = 'scoped memory for tpu_custom_call.1']
    #allocation5 [shape = 'u8[2048]{0}', space=vmem, size = 0x800, scoped, tag = 'input window, operand 1, single buffered']
    #allocation6 [shape = 's32[1]{0}', space=sflag, size = 0x4, scoped, tag = 'scoped memory for tpu_custom_call.1']
    #allocation7 [shape = 'u8[512]{0}', space=vmem, size = 0x400, scoped, tag = 'input window, operand 2, single buffered']
    #allocation8 [shape = 'u8[512]{0}', space=vmem, size = 0x400, scoped, tag = 'input window, operand 3, single buffered']
    #allocation9 [shape = 's32[1]{0}', space=sflag, size = 0x4, scoped, tag = 'scoped memory for tpu_custom_call.1']
    #allocation10 [shape = 'u8[196608]{0}', space=vmem, size = 0x30000, scoped, tag = 'input window, operand 5, single buffered']
    #allocation11 [shape = 'u8[3072]{0}', space=vmem, size = 0xc00, scoped, tag = 'input window, operand 6, single buffered']
    #allocation12 [shape = 's32[1]{0}', space=sflag, size = 0x4, scoped, tag = 'scoped memory for tpu_custom_call.1']
    #allocation13 [shape = 'u8[65536]{0}', space=vmem, size = 0x10000, scoped, tag = 'input window, operand 7, single buffered']
    #allocation14 [shape = 'u8[1024]{0}', space=vmem, size = 0x400, scoped, tag = 'input window, operand 8, single buffered']
    #allocation15 [shape = 's32[1]{0}', space=sflag, size = 0x4, scoped, tag = 'scoped memory for tpu_custom_call.1']
    #allocation16 [shape = 'u8[1024]{0}', space=vmem, size = 0x400, scoped, tag = 'input window, operand 10, single buffered']
    #allocation17 [shape = 'u8[131072]{0}', space=vmem, size = 0x20000, scoped, tag = 'input window, operand 11, single buffered']
    #allocation18 [shape = 's32[1]{0}', space=sflag, size = 0x4, scoped, tag = 'scoped memory for tpu_custom_call.1']
    #allocation19 [shape = 'u8[131072]{0}', space=vmem, size = 0x20000, scoped, tag = 'input window, operand 13, single buffered']
    #allocation20 [shape = 'u8[8192]{0}', space=vmem, size = 0x2000, scoped, tag = 'output window, operand 0']
    %22 = vsyncpa [#allocation3], 0
    %s23 = scalar_lea.sflag [#allocation3], 1
    %24 = vsyncpa %s23, 0
    %25 = vsyncpa [#allocation6], 0
    %26 = vsyncpa [#allocation9], 0
    %27 = vsyncpa [#allocation12], 0
    %28 = vsyncpa [#allocation15], 0
    %29 = vsyncpa [#allocation18], 0
    %30 = vsyncpa [#allocation4], 0
    %s31 = scalar_lea.sflag [#allocation4], 1
    %32 = vsyncpa %s31, 0
    loop: start=0, step=1, limit=4
    $region2: #{tpu_custom_call.1} parent=1 // loop_pre_header
      _
    $region3: #{tpu_custom_call.1} parent=1 // loop_header
      %s34 = sphi 0, %s38
      %p35 = scmp.ge.s32.totalorder %s34, 4
      %s44 = sphi 0, %s46
      %s47 = sphi 0, %s44
      %s48 = sphi 0, %s47
      %s64 = sphi 0, %s48
      %s68 = sphi 0, %s68
      %s70 = sphi 0, %s68
      %s71 = sphi 0, %s70
      %s85 = sphi 0, %s71
      %s89 = sphi 0, %s89
      %s91 = sphi 0, %s89
      %s92 = sphi 0, %s91
      %s106 = sphi 0, %s92
      %s110 = sphi 0, %s110
      %s112 = sphi 0, %s110
      %s113 = sphi 0, %s112
      %s127 = sphi 0, %s113
      %s133 = sphi 0, %s135
      %s136 = sphi 0, %s133
      %s137 = sphi 0, %s136
      %s153 = sphi 0, %s137
      %s157 = sphi 0, %s157
      %s159 = sphi 0, %s157
      %s160 = sphi 0, %s159
      %s174 = sphi 0, %s160
      %s178 = sphi 0, %s178
      %s180 = sphi 0, %s178
      %s181 = sphi 0, %s180
      %s195 = sphi 0, %s181
      %s199 = sphi 0, %s199
      %s201 = sphi 0, %s199
      %s202 = sphi 0, %s201
      %s216 = sphi 0, %s202
      %s220 = sphi 0, %s220
      %s222 = sphi 0, %s220
      %s223 = sphi 0, %s222
      %s237 = sphi 0, %s223
      %s241 = sphi 0, %s241
      %s243 = sphi 0, %s241
      %s244 = sphi 0, %s243
      %s258 = sphi 0, %s244
      %s262 = sphi 0, %s262
      %s264 = sphi 0, %s262
      %s265 = sphi 0, %s264
      %s279 = sphi 0, %s265
      %s283 = sphi 0, %s283
      %s285 = sphi 0, %s283
      %s286 = sphi 0, %s285
      %s300 = sphi 0, %s286
      %s304 = sphi 0, %s304
      %s306 = sphi 0, %s304
      %s307 = sphi 0, %s306
      %s321 = sphi 0, %s307
      %s325 = sphi 0, %s325
      %s327 = sphi 0, %s325
      %s328 = sphi 0, %s327
      %s342 = sphi 0, %s328
      %s346 = sphi 0, %s346
      %s348 = sphi 0, %s346
      %s349 = sphi 0, %s348
      %s363 = sphi 0, %s349
      %s367 = sphi 0, %s367
      %s369 = sphi 0, %s367
      %s370 = sphi 0, %s369
      %s384 = sphi 0, %s370
      %s388 = sphi 0, %s388
      %s390 = sphi 0, %s388
      %s391 = sphi 0, %s390
      %s405 = sphi 0, %s391
      %s411 = sphi 0, %s413
      %s414 = sphi 0, %s411
      %s415 = sphi 0, %s414
      %s431 = sphi 0, %s415
    $region4: #{tpu_custom_call.1} parent=1 // loop_header_branch
      %37 = sbr.rel (%p35) target = $region8
    $region5: #{tpu_custom_call.1} parent=1 // loop_body
      %s39 = ssub.s32 %s34, 1
      %s40 = ssub.s32 %s34, 2
      %s41 = sadd.s32 %s34, 1
      %s42 = ssub.s32 %s34, %s41
      %p43 = scmp.eq.s32.totalorder %s42, 0
      %s45 = sadd.s32 %s44, 1
      %s46 = scalar_select %p43, %s44, %s45
      %p49 = pneg %p43
      %p50 = scmp.eq.s32.totalorder %s34, 1
      %p51 = por %p49, %p50
      %p52 = scmp.ne.s32.totalorder %s44, %s47
      %p53 = scmp.eq.s32.totalorder %s34, 0
      %p54 = por %p52, %p53
      %p55 = scmp.ne.s32.totalorder %s44, %s47
      %p56 = scmp.eq.s32.totalorder %s39, 1
      %p57 = por %p55, %p56
      %p58 = scmp.ne.s32.totalorder %s47, %s48
      %p59 = scmp.eq.s32.totalorder %s39, 0
      %p60 = por %p58, %p59
      %p61 = scmp.ne.s32.totalorder %s47, %s48
      %p62 = scmp.eq.s32.totalorder %s40, 1
      %p63 = por %p61, %p62
      %p65 = scmp.ne.s32.totalorder %s48, %s64
      %p66 = scmp.eq.s32.totalorder %s40, 0
      %p67 = por %p65, %p66
      %s69 = sadd.s32 %s68, 1
      %p72 = scmp.eq.s32.totalorder %s34, 1
      %p73 = scmp.ne.s32.totalorder %s68, %s70
      %p74 = scmp.eq.s32.totalorder %s34, 0
      %p75 = por %p73, %p74
      %p76 = scmp.ne.s32.totalorder %s68, %s70
      %p77 = scmp.eq.s32.totalorder %s39, 1
      %p78 = por %p76, %p77
      %p79 = scmp.ne.s32.totalorder %s70, %s71
      %p80 = scmp.eq.s32.totalorder %s39, 0
      %p81 = por %p79, %p80
      %p82 = scmp.ne.s32.totalorder %s70, %s71
      %p83 = scmp.eq.s32.totalorder %s40, 1
      %p84 = por %p82, %p83
      %p86 = scmp.ne.s32.totalorder %s71, %s85
      %p87 = scmp.eq.s32.totalorder %s40, 0
      %p88 = por %p86, %p87
      %s90 = sadd.s32 %s89, 1
      %p93 = scmp.eq.s32.totalorder %s34, 1
      %p94 = scmp.ne.s32.totalorder %s89, %s91
      %p95 = scmp.eq.s32.totalorder %s34, 0
      %p96 = por %p94, %p95
      %p97 = scmp.ne.s32.totalorder %s89, %s91
      %p98 = scmp.eq.s32.totalorder %s39, 1
      %p99 = por %p97, %p98
      %p100 = scmp.ne.s32.totalorder %s91, %s92
      %p101 = scmp.eq.s32.totalorder %s39, 0
      %p102 = por %p100, %p101
      %p103 = scmp.ne.s32.totalorder %s91, %s92
      %p104 = scmp.eq.s32.totalorder %s40, 1
      %p105 = por %p103, %p104
      %p107 = scmp.ne.s32.totalorder %s92, %s106
      %p108 = scmp.eq.s32.totalorder %s40, 0
      %p109 = por %p107, %p108
      %s111 = sadd.s32 %s110, 1
      %p114 = scmp.eq.s32.totalorder %s34, 1
      %p115 = scmp.ne.s32.totalorder %s110, %s112
      %p116 = scmp.eq.s32.totalorder %s34, 0
      %p117 = por %p115, %p116
      %p118 = scmp.ne.s32.totalorder %s110, %s112
      %p119 = scmp.eq.s32.totalorder %s39, 1
      %p120 = por %p118, %p119
      %p121 = scmp.ne.s32.totalorder %s112, %s113
      %p122 = scmp.eq.s32.totalorder %s39, 0
      %p123 = por %p121, %p122
      %p124 = scmp.ne.s32.totalorder %s112, %s113
      %p125 = scmp.eq.s32.totalorder %s40, 1
      %p126 = por %p124, %p125
      %p128 = scmp.ne.s32.totalorder %s113, %s127
      %p129 = scmp.eq.s32.totalorder %s40, 0
      %p130 = por %p128, %p129
      %s131 = ssub.s32 %s34, %s41
      %p132 = scmp.eq.s32.totalorder %s131, 0
      %s134 = sadd.s32 %s133, 1
      %s135 = scalar_select %p132, %s133, %s134
      %p138 = pneg %p132
      %p139 = scmp.eq.s32.totalorder %s34, 1
      %p140 = por %p138, %p139
      %p141 = scmp.ne.s32.totalorder %s133, %s136
      %p142 = scmp.eq.s32.totalorder %s34, 0
      %p143 = por %p141, %p142
      %p144 = scmp.ne.s32.totalorder %s133, %s136
      %p145 = scmp.eq.s32.totalorder %s39, 1
      %p146 = por %p144, %p145
      %p147 = scmp.ne.s32.totalorder %s136, %s137
      %p148 = scmp.eq.s32.totalorder %s39, 0
      %p149 = por %p147, %p148
      %p150 = scmp.ne.s32.totalorder %s136, %s137
      %p151 = scmp.eq.s32.totalorder %s40, 1
      %p152 = por %p150, %p151
      %p154 = scmp.ne.s32.totalorder %s137, %s153
      %p155 = scmp.eq.s32.totalorder %s40, 0
      %p156 = por %p154, %p155
      %s158 = sadd.s32 %s157, 1
      %p161 = scmp.eq.s32.totalorder %s34, 1
      %p162 = scmp.ne.s32.totalorder %s157, %s159
      %p163 = scmp.eq.s32.totalorder %s34, 0
      %p164 = por %p162, %p163
      %p165 = scmp.ne.s32.totalorder %s157, %s159
      %p166 = scmp.eq.s32.totalorder %s39, 1
      %p167 = por %p165, %p166
      %p168 = scmp.ne.s32.totalorder %s159, %s160
      %p169 = scmp.eq.s32.totalorder %s39, 0
      %p170 = por %p168, %p169
      %p171 = scmp.ne.s32.totalorder %s159, %s160
      %p172 = scmp.eq.s32.totalorder %s40, 1
      %p173 = por %p171, %p172
      %p175 = scmp.ne.s32.totalorder %s160, %s174
      %p176 = scmp.eq.s32.totalorder %s40, 0
      %p177 = por %p175, %p176
      %s179 = sadd.s32 %s178, 1
      %p182 = scmp.eq.s32.totalorder %s34, 1
      %p183 = scmp.ne.s32.totalorder %s178, %s180
      %p184 = scmp.eq.s32.totalorder %s34, 0
      %p185 = por %p183, %p184
      %p186 = scmp.ne.s32.totalorder %s178, %s180
      %p187 = scmp.eq.s32.totalorder %s39, 1
      %p188 = por %p186, %p187
      %p189 = scmp.ne.s32.totalorder %s180, %s181
      %p190 = scmp.eq.s32.totalorder %s39, 0
      %p191 = por %p189, %p190
      %p192 = scmp.ne.s32.totalorder %s180, %s181
      %p193 = scmp.eq.s32.totalorder %s40, 1
      %p194 = por %p192, %p193
      %p196 = scmp.ne.s32.totalorder %s181, %s195
      %p197 = scmp.eq.s32.totalorder %s40, 0
      %p198 = por %p196, %p197
      %s200 = sadd.s32 %s199, 1
      %p203 = scmp.eq.s32.totalorder %s34, 1
      %p204 = scmp.ne.s32.totalorder %s199, %s201
      %p205 = scmp.eq.s32.totalorder %s34, 0
      %p206 = por %p204, %p205
      %p207 = scmp.ne.s32.totalorder %s199, %s201
      %p208 = scmp.eq.s32.totalorder %s39, 1
      %p209 = por %p207, %p208
      %p210 = scmp.ne.s32.totalorder %s201, %s202
      %p211 = scmp.eq.s32.totalorder %s39, 0
      %p212 = por %p210, %p211
      %p213 = scmp.ne.s32.totalorder %s201, %s202
      %p214 = scmp.eq.s32.totalorder %s40, 1
      %p215 = por %p213, %p214
      %p217 = scmp.ne.s32.totalorder %s202, %s216
      %p218 = scmp.eq.s32.totalorder %s40, 0
      %p219 = por %p217, %p218
      %s221 = sadd.s32 %s220, 1
      %p224 = scmp.eq.s32.totalorder %s34, 1
      %p225 = scmp.ne.s32.totalorder %s220, %s222
      %p226 = scmp.eq.s32.totalorder %s34, 0
      %p227 = por %p225, %p226
      %p228 = scmp.ne.s32.totalorder %s220, %s222
      %p229 = scmp.eq.s32.totalorder %s39, 1
      %p230 = por %p228, %p229
      %p231 = scmp.ne.s32.totalorder %s222, %s223
      %p232 = scmp.eq.s32.totalorder %s39, 0
      %p233 = por %p231, %p232
      %p234 = scmp.ne.s32.totalorder %s222, %s223
      %p235 = scmp.eq.s32.totalorder %s40, 1
      %p236 = por %p234, %p235
      %p238 = scmp.ne.s32.totalorder %s223, %s237
      %p239 = scmp.eq.s32.totalorder %s40, 0
      %p240 = por %p238, %p239
      %s242 = sadd.s32 %s241, 1
      %p245 = scmp.eq.s32.totalorder %s34, 1
      %p246 = scmp.ne.s32.totalorder %s241, %s243
      %p247 = scmp.eq.s32.totalorder %s34, 0
      %p248 = por %p246, %p247
      %p249 = scmp.ne.s32.totalorder %s241, %s243
      %p250 = scmp.eq.s32.totalorder %s39, 1
      %p251 = por %p249, %p250
      %p252 = scmp.ne.s32.totalorder %s243, %s244
      %p253 = scmp.eq.s32.totalorder %s39, 0
      %p254 = por %p252, %p253
      %p255 = scmp.ne.s32.totalorder %s243, %s244
      %p256 = scmp.eq.s32.totalorder %s40, 1
      %p257 = por %p255, %p256
      %p259 = scmp.ne.s32.totalorder %s244, %s258
      %p260 = scmp.eq.s32.totalorder %s40, 0
      %p261 = por %p259, %p260
      %s263 = sadd.s32 %s262, 1
      %p266 = scmp.eq.s32.totalorder %s34, 1
      %p267 = scmp.ne.s32.totalorder %s262, %s264
      %p268 = scmp.eq.s32.totalorder %s34, 0
      %p269 = por %p267, %p268
      %p270 = scmp.ne.s32.totalorder %s262, %s264
      %p271 = scmp.eq.s32.totalorder %s39, 1
      %p272 = por %p270, %p271
      %p273 = scmp.ne.s32.totalorder %s264, %s265
      %p274 = scmp.eq.s32.totalorder %s39, 0
      %p275 = por %p273, %p274
      %p276 = scmp.ne.s32.totalorder %s264, %s265
      %p277 = scmp.eq.s32.totalorder %s40, 1
      %p278 = por %p276, %p277
      %p280 = scmp.ne.s32.totalorder %s265, %s279
      %p281 = scmp.eq.s32.totalorder %s40, 0
      %p282 = por %p280, %p281
      %s284 = sadd.s32 %s283, 1
      %p287 = scmp.eq.s32.totalorder %s34, 1
      %p288 = scmp.ne.s32.totalorder %s283, %s285
      %p289 = scmp.eq.s32.totalorder %s34, 0
      %p290 = por %p288, %p289
      %p291 = scmp.ne.s32.totalorder %s283, %s285
      %p292 = scmp.eq.s32.totalorder %s39, 1
      %p293 = por %p291, %p292
      %p294 = scmp.ne.s32.totalorder %s285, %s286
      %p295 = scmp.eq.s32.totalorder %s39, 0
      %p296 = por %p294, %p295
      %p297 = scmp.ne.s32.totalorder %s285, %s286
      %p298 = scmp.eq.s32.totalorder %s40, 1
      %p299 = por %p297, %p298
      %p301 = scmp.ne.s32.totalorder %s286, %s300
      %p302 = scmp.eq.s32.totalorder %s40, 0
      %p303 = por %p301, %p302
      %s305 = sadd.s32 %s304, 1
      %p308 = scmp.eq.s32.totalorder %s34, 1
      %p309 = scmp.ne.s32.totalorder %s304, %s306
      %p310 = scmp.eq.s32.totalorder %s34, 0
      %p311 = por %p309, %p310
      %p312 = scmp.ne.s32.totalorder %s304, %s306
      %p313 = scmp.eq.s32.totalorder %s39, 1
      %p314 = por %p312, %p313
      %p315 = scmp.ne.s32.totalorder %s306, %s307
      %p316 = scmp.eq.s32.totalorder %s39, 0
      %p317 = por %p315, %p316
      %p318 = scmp.ne.s32.totalorder %s306, %s307
      %p319 = scmp.eq.s32.totalorder %s40, 1
      %p320 = por %p318, %p319
      %p322 = scmp.ne.s32.totalorder %s307, %s321
      %p323 = scmp.eq.s32.totalorder %s40, 0
      %p324 = por %p322, %p323
      %s326 = sadd.s32 %s325, 1
      %p329 = scmp.eq.s32.totalorder %s34, 1
      %p330 = scmp.ne.s32.totalorder %s325, %s327
      %p331 = scmp.eq.s32.totalorder %s34, 0
      %p332 = por %p330, %p331
      %p333 = scmp.ne.s32.totalorder %s325, %s327
      %p334 = scmp.eq.s32.totalorder %s39, 1
      %p335 = por %p333, %p334
      %p336 = scmp.ne.s32.totalorder %s327, %s328
      %p337 = scmp.eq.s32.totalorder %s39, 0
      %p338 = por %p336, %p337
      %p339 = scmp.ne.s32.totalorder %s327, %s328
      %p340 = scmp.eq.s32.totalorder %s40, 1
      %p341 = por %p339, %p340
      %p343 = scmp.ne.s32.totalorder %s328, %s342
      %p344 = scmp.eq.s32.totalorder %s40, 0
      %p345 = por %p343, %p344
      %s347 = sadd.s32 %s346, 1
      %p350 = scmp.eq.s32.totalorder %s34, 1
      %p351 = scmp.ne.s32.totalorder %s346, %s348
      %p352 = scmp.eq.s32.totalorder %s34, 0
      %p353 = por %p351, %p352
      %p354 = scmp.ne.s32.totalorder %s346, %s348
      %p355 = scmp.eq.s32.totalorder %s39, 1
      %p356 = por %p354, %p355
      %p357 = scmp.ne.s32.totalorder %s348, %s349
      %p358 = scmp.eq.s32.totalorder %s39, 0
      %p359 = por %p357, %p358
      %p360 = scmp.ne.s32.totalorder %s348, %s349
      %p361 = scmp.eq.s32.totalorder %s40, 1
      %p362 = por %p360, %p361
      %p364 = scmp.ne.s32.totalorder %s349, %s363
      %p365 = scmp.eq.s32.totalorder %s40, 0
      %p366 = por %p364, %p365
      %s368 = sadd.s32 %s367, 1
      %p371 = scmp.eq.s32.totalorder %s34, 1
      %p372 = scmp.ne.s32.totalorder %s367, %s369
      %p373 = scmp.eq.s32.totalorder %s34, 0
      %p374 = por %p372, %p373
      %p375 = scmp.ne.s32.totalorder %s367, %s369
      %p376 = scmp.eq.s32.totalorder %s39, 1
      %p377 = por %p375, %p376
      %p378 = scmp.ne.s32.totalorder %s369, %s370
      %p379 = scmp.eq.s32.totalorder %s39, 0
      %p380 = por %p378, %p379
      %p381 = scmp.ne.s32.totalorder %s369, %s370
      %p382 = scmp.eq.s32.totalorder %s40, 1
      %p383 = por %p381, %p382
      %p385 = scmp.ne.s32.totalorder %s370, %s384
      %p386 = scmp.eq.s32.totalorder %s40, 0
      %p387 = por %p385, %p386
      %s389 = sadd.s32 %s388, 1
      %p392 = scmp.eq.s32.totalorder %s34, 1
      %p393 = scmp.ne.s32.totalorder %s388, %s390
      %p394 = scmp.eq.s32.totalorder %s34, 0
      %p395 = por %p393, %p394
      %p396 = scmp.ne.s32.totalorder %s388, %s390
      %p397 = scmp.eq.s32.totalorder %s39, 1
      %p398 = por %p396, %p397
      %p399 = scmp.ne.s32.totalorder %s390, %s391
      %p400 = scmp.eq.s32.totalorder %s39, 0
      %p401 = por %p399, %p400
      %p402 = scmp.ne.s32.totalorder %s390, %s391
      %p403 = scmp.eq.s32.totalorder %s40, 1
      %p404 = por %p402, %p403
      %p406 = scmp.ne.s32.totalorder %s391, %s405
      %p407 = scmp.eq.s32.totalorder %s40, 0
      %p408 = por %p406, %p407
      %s409 = ssub.s32 %s34, %s41
      %p410 = scmp.eq.s32.totalorder %s409, 0
      %s412 = sadd.s32 %s411, 1
      %s413 = scalar_select %p410, %s411, %s412
      %p416 = pneg %p410
      %p417 = scmp.eq.s32.totalorder %s34, 1
      %p418 = por %p416, %p417
      %p419 = scmp.ne.s32.totalorder %s411, %s414
      %p420 = scmp.eq.s32.totalorder %s34, 0
      %p421 = por %p419, %p420
      %p422 = scmp.ne.s32.totalorder %s411, %s414
      %p423 = scmp.eq.s32.totalorder %s39, 1
      %p424 = por %p422, %p423
      %p425 = scmp.ne.s32.totalorder %s414, %s415
      %p426 = scmp.eq.s32.totalorder %s39, 0
      %p427 = por %p425, %p426
      %p428 = scmp.ne.s32.totalorder %s414, %s415
      %p429 = scmp.eq.s32.totalorder %s40, 1
      %p430 = por %p428, %p429
      %p432 = scmp.ne.s32.totalorder %s415, %s431
      %p433 = scmp.eq.s32.totalorder %s40, 0
      %p434 = por %p432, %p433
      %p435 = scmp.le.s32.totalorder 1, %s34
      %p436 = scmp.lt.s32.totalorder %s34, 3
      %p437 = pnand %p435, %p436
      %p438 = pneg %p437
      // Predicated region
      $region9: #{tpu_custom_call.1} parent=5 // pred_check
        _
      $region10: #{tpu_custom_call.1} parent=5 // pred_check_branch
        %440 = sbr.rel (%p437) target = $region12
      $region11: #{tpu_custom_call.1} parent=5 // pred_region
        %s441 = ssub.s32 %s34, 1
        // Predicated region
        $region13: #{tpu_custom_call.1} parent=11 // pred_check
          %p442 = pneg %p81
        $region14: #{tpu_custom_call.1} parent=11 // pred_check_branch
          %444 = sbr.rel (%p442) target = $region16
        $region15: #{tpu_custom_call.1} parent=11 // pred_region
          %446 = vsyncadd [#allocation6], 0
          %s448 = sshll.u32 %s1, 4
          %s449 = int_to_ptr.hbm [resolvable:$true] %s448
          %s450 = sshll.u32 [#allocation5], 4
          %s451 = int_to_ptr.vmem [resolvable:$true] %s450
          %453 = dma.hbm_to_vmem [thread:$0]  %s449, 64, %s451, [#allocation6]
        $region16: #{tpu_custom_call.1} parent=11 // pred_fallthru
          _
        // Predicated region
        $region17: #{tpu_custom_call.1} parent=11 // pred_check
          %p454 = pneg %p102
        $region18: #{tpu_custom_call.1} parent=11 // pred_check_branch
          %456 = sbr.rel (%p454) target = $region20
        $region19: #{tpu_custom_call.1} parent=11 // pred_region
          %458 = vsyncadd [#allocation6], 0
          %s460 = sshll.u32 %s2, 4
          %s461 = int_to_ptr.hbm [resolvable:$true] %s460
          %s462 = sshll.u32 [#allocation7], 4
          %s463 = int_to_ptr.vmem [resolvable:$true] %s462
          %465 = dma.hbm_to_vmem [thread:$0]  %s461, 16, %s463, [#allocation6]
        $region20: #{tpu_custom_call.1} parent=11 // pred_fallthru
          _
        // Predicated region
        $region21: #{tpu_custom_call.1} parent=11 // pred_check
          %p466 = pneg %p123
        $region22: #{tpu_custom_call.1} parent=11 // pred_check_branch
          %468 = sbr.rel (%p466) target = $region24
        $region23: #{tpu_custom_call.1} parent=11 // pred_region
          %470 = vsyncadd [#allocation9], 0
          %s472 = sshll.u32 %s3, 4
          %s473 = int_to_ptr.hbm [resolvable:$true] %s472
          %s474 = sshll.u32 [#allocation8], 4
          %s475 = int_to_ptr.vmem [resolvable:$true] %s474
          %477 = dma.hbm_to_vmem [thread:$0]  %s473, 16, %s475, [#allocation9]
        $region24: #{tpu_custom_call.1} parent=11 // pred_fallthru
          _
        // Predicated region
        $region25: #{tpu_custom_call.1} parent=11 // pred_check
          %p478 = pneg %p170
        $region26: #{tpu_custom_call.1} parent=11 // pred_check_branch
          %480 = sbr.rel (%p478) target = $region28
        $region27: #{tpu_custom_call.1} parent=11 // pred_region
          %482 = vsyncadd [#allocation9], 0
          %s483 = sshll.u32 %s5, 4
          %s484 = int_to_ptr.hbm [resolvable:$true] %s483
          %s485 = sshll.u32 [#allocation10], 4
          %s486 = int_to_ptr.vmem [resolvable:$true] %s485
          %491 = dma.hbm_to_vmem [thread:$0]  %s484, 6144, %s486, [#allocation9], 192, 192, 12
        $region28: #{tpu_custom_call.1} parent=11 // pred_fallthru
          _
        // Predicated region
        $region29: #{tpu_custom_call.1} parent=11 // pred_check
          %p492 = pneg %p191
        $region30: #{tpu_custom_call.1} parent=11 // pred_check_branch
          %494 = sbr.rel (%p492) target = $region32
        $region31: #{tpu_custom_call.1} parent=11 // pred_region
          %496 = vsyncadd [#allocation12], 0
          %s497 = sshll.u32 %s6, 4
          %s498 = int_to_ptr.hbm [resolvable:$true] %s497
          %s499 = sshll.u32 [#allocation11], 4
          %s500 = int_to_ptr.vmem [resolvable:$true] %s499
          %505 = dma.hbm_to_vmem [thread:$0]  %s498, 96, %s500, [#allocation12], 48, 48, 3
        $region32: #{tpu_custom_call.1} parent=11 // pred_fallthru
          _
        // Predicated region
        $region33: #{tpu_custom_call.1} parent=11 // pred_check
          %p506 = pneg %p212
        $region34: #{tpu_custom_call.1} parent=11 // pred_check_branch
          %508 = sbr.rel (%p506) target = $region36
        $region35: #{tpu_custom_call.1} parent=11 // pred_region
          %510 = vsyncadd [#allocation12], 0
          %s511 = sshll.u32 %s7, 4
          %s512 = int_to_ptr.hbm [resolvable:$true] %s511
          %s513 = sshll.u32 [#allocation13], 4
          %s514 = int_to_ptr.vmem [resolvable:$true] %s513
          %519 = dma.hbm_to_vmem [thread:$0]  %s512, 2048, %s514, [#allocation12], 64, 64, 4
        $region36: #{tpu_custom_call.1} parent=11 // pred_fallthru
          _
        // Predicated region
        $region37: #{tpu_custom_call.1} parent=11 // pred_check
          %p520 = pneg %p233
        $region38: #{tpu_custom_call.1} parent=11 // pred_check_branch
          %522 = sbr.rel (%p520) target = $region40
        $region39: #{tpu_custom_call.1} parent=11 // pred_region
          %524 = vsyncadd [#allocation15], 0
          %s525 = sshll.u32 %s8, 4
          %s526 = int_to_ptr.hbm [resolvable:$true] %s525
          %s527 = sshll.u32 [#allocation14], 4
          %s528 = int_to_ptr.vmem [resolvable:$true] %s527
          %533 = dma.hbm_to_vmem [thread:$0]  %s526, 32, %s528, [#allocation15], 16, 16, 1
        $region40: #{tpu_custom_call.1} parent=11 // pred_fallthru
          _
        // Predicated region
        $region41: #{tpu_custom_call.1} parent=11 // pred_check
          %p534 = pneg %p254
        $region42: #{tpu_custom_call.1} parent=11 // pred_check_branch
          %536 = sbr.rel (%p534) target = $region44
        $region43: #{tpu_custom_call.1} parent=11 // pred_region
          _
        $region44: #{tpu_custom_call.1} parent=11 // pred_fallthru
          _
        // Predicated region
        $region45: #{tpu_custom_call.1} parent=11 // pred_check
          %p537 = pneg %p275
        $region46: #{tpu_custom_call.1} parent=11 // pred_check_branch
          %539 = sbr.rel (%p537) target = $region48
        $region47: #{tpu_custom_call.1} parent=11 // pred_region
          %541 = vsyncadd [#allocation15], 0
          %s542 = sshll.u32 %s10, 4
          %s543 = int_to_ptr.hbm [resolvable:$true] %s542
          %s544 = sshll.u32 [#allocation16], 4
          %s545 = int_to_ptr.vmem [resolvable:$true] %s544
          %550 = dma.hbm_to_vmem [thread:$0]  %s543, 32, %s545, [#allocation15], 16, 16, 1
        $region48: #{tpu_custom_call.1} parent=11 // pred_fallthru
          _
        // Predicated region
        $region49: #{tpu_custom_call.1} parent=11 // pred_check
          %p551 = pneg %p296
        $region50: #{tpu_custom_call.1} parent=11 // pred_check_branch
          %553 = sbr.rel (%p551) target = $region52
        $region51: #{tpu_custom_call.1} parent=11 // pred_region
          %555 = vsyncadd [#allocation18], 0
          %s556 = sshll.u32 %s11, 4
          %s557 = int_to_ptr.hbm [resolvable:$true] %s556
          %s558 = sshll.u32 [#allocation17], 4
          %s559 = int_to_ptr.vmem [resolvable:$true] %s558
          %564 = dma.hbm_to_vmem [thread:$0]  %s557, 4096, %s559, [#allocation18], 128, 128, 8
        $region52: #{tpu_custom_call.1} parent=11 // pred_fallthru
          _
        // Predicated region
        $region53: #{tpu_custom_call.1} parent=11 // pred_check
          %p565 = pneg %p317
        $region54: #{tpu_custom_call.1} parent=11 // pred_check_branch
          %567 = sbr.rel (%p565) target = $region56
        $region55: #{tpu_custom_call.1} parent=11 // pred_region
          _
        $region56: #{tpu_custom_call.1} parent=11 // pred_fallthru
          _
        // Predicated region
        $region57: #{tpu_custom_call.1} parent=11 // pred_check
          %p568 = pneg %p338
        $region58: #{tpu_custom_call.1} parent=11 // pred_check_branch
          %570 = sbr.rel (%p568) target = $region60
        $region59: #{tpu_custom_call.1} parent=11 // pred_region
          %572 = vsyncadd [#allocation18], 0
          %s573 = sshll.u32 %s13, 4
          %s574 = int_to_ptr.hbm [resolvable:$true] %s573
          %s575 = sshll.u32 [#allocation19], 4
          %s576 = int_to_ptr.vmem [resolvable:$true] %s575
          %581 = dma.hbm_to_vmem [thread:$0]  %s574, 4096, %s576, [#allocation18], 64, 64, 4
        $region60: #{tpu_custom_call.1} parent=11 // pred_fallthru
          _
        // Predicated region
        $region61: #{tpu_custom_call.1} parent=11 // pred_check
          %p582 = pneg %p359
        $region62: #{tpu_custom_call.1} parent=11 // pred_check_branch
          %584 = sbr.rel (%p582) target = $region64
        $region63: #{tpu_custom_call.1} parent=11 // pred_region
          _
        $region64: #{tpu_custom_call.1} parent=11 // pred_fallthru
          _
        // Predicated region
        $region65: #{tpu_custom_call.1} parent=11 // pred_check
          %p585 = pneg %p380
        $region66: #{tpu_custom_call.1} parent=11 // pred_check_branch
          %587 = sbr.rel (%p585) target = $region68
        $region67: #{tpu_custom_call.1} parent=11 // pred_region
          _
        $region68: #{tpu_custom_call.1} parent=11 // pred_fallthru
          _
        // Predicated region
        $region69: #{tpu_custom_call.1} parent=11 // pred_check
          %p588 = pneg %p401
        $region70: #{tpu_custom_call.1} parent=11 // pred_check_branch
          %590 = sbr.rel (%p588) target = $region72
        $region71: #{tpu_custom_call.1} parent=11 // pred_region
          _
        $region72: #{tpu_custom_call.1} parent=11 // pred_fallthru
          _
      $region12: #{tpu_custom_call.1} parent=5 // pred_fallthru
        _
      %p591 = scmp.lt.s32.totalorder %s34, 2
      // Predicated region
      $region73: #{tpu_custom_call.1} parent=5 // pred_check
        %p592 = pneg %p591
      $region74: #{tpu_custom_call.1} parent=5 // pred_check_branch
        %594 = sbr.rel (%p592) target = $region76
      $region75: #{tpu_custom_call.1} parent=5 // pred_region
        // Predicated region
        $region77: #{tpu_custom_call.1} parent=75 // pred_check
          %p595 = pneg %p54
        $region78: #{tpu_custom_call.1} parent=75 // pred_check_branch
          %597 = sbr.rel (%p595) target = $region80
        $region79: #{tpu_custom_call.1} parent=75 // pred_region
          %s598 = sand.u32 %s44, 1
          %s599 = scalar_lea.sflag [#allocation3], %s598
          %s600 = sand.u32 %s44, 1
          %s601 = smul.addr %s600, 4
          %s602 = scalar_lea.vmem [#allocation2], %s601
          %604 = vsyncadd %s599, 0
          %s605 = smul.addr %s34, 4
          %s606 = scalar_lea.hbm %s0, %s605
          %s608 = sshll.u32 %s606, 4
          %s609 = int_to_ptr.hbm [resolvable:$true] %s608
          %s610 = sshll.u32 %s602, 4
          %s611 = int_to_ptr.vmem [resolvable:$true] %s610
          %613 = dma.hbm_to_vmem [thread:$0]  %s609, 64, %s611, %s599
        $region80: #{tpu_custom_call.1} parent=75 // pred_fallthru
          _
        // Predicated region
        $region81: #{tpu_custom_call.1} parent=75 // pred_check
          %p614 = pneg %p143
        $region82: #{tpu_custom_call.1} parent=75 // pred_check_branch
          %616 = sbr.rel (%p614) target = $region84
        $region83: #{tpu_custom_call.1} parent=75 // pred_region
          %p617 = scmp.lt.s32.totalorder %s34, 1
          %s618 = scalar_select %p617, %s34, 1
          %s619 = scalar_lea.vmem %s4, %s618
        $region84: #{tpu_custom_call.1} parent=75 // pred_fallthru
          _
      $region76: #{tpu_custom_call.1} parent=5 // pred_fallthru
        _
      %p620 = scmp.le.s32.totalorder 1, %s34
      %p621 = scmp.lt.s32.totalorder %s34, 3
      %p622 = pnand %p620, %p621
      %p623 = pneg %p622
      // Predicated region
      $region85: #{tpu_custom_call.1} parent=5 // pred_check
        _
      $region86: #{tpu_custom_call.1} parent=5 // pred_check_branch
        %625 = sbr.rel (%p622) target = $region88
      $region87: #{tpu_custom_call.1} parent=5 // pred_region
        %s626 = ssub.s32 %s34, 1
        %s627 = sand.u32 %s47, 1
        %s628 = scalar_lea.sflag [#allocation3], %s627
        %s629 = sand.u32 %s47, 1
        %s630 = smul.addr %s629, 4
        %s631 = scalar_lea.vmem [#allocation2], %s630
        // Predicated region
        $region89: #{tpu_custom_call.1} parent=87 // pred_check
          %p632 = pneg %p60
        $region90: #{tpu_custom_call.1} parent=87 // pred_check_branch
          %634 = sbr.rel (%p632) target = $region92
        $region91: #{tpu_custom_call.1} parent=87 // pred_region
          %636 = dma.done %s628, 64
        $region92: #{tpu_custom_call.1} parent=87 // pred_fallthru
          _
        // Predicated region
        $region93: #{tpu_custom_call.1} parent=87 // pred_check
          %p637 = pneg %p81
        $region94: #{tpu_custom_call.1} parent=87 // pred_check_branch
          %639 = sbr.rel (%p637) target = $region96
        $region95: #{tpu_custom_call.1} parent=87 // pred_region
          %641 = dma.done [#allocation6], 64
        $region96: #{tpu_custom_call.1} parent=87 // pred_fallthru
          _
        // Predicated region
        $region97: #{tpu_custom_call.1} parent=87 // pred_check
          %p642 = pneg %p102
        $region98: #{tpu_custom_call.1} parent=87 // pred_check_branch
          %644 = sbr.rel (%p642) target = $region100
        $region99: #{tpu_custom_call.1} parent=87 // pred_region
          %646 = dma.done [#allocation6], 16
        $region100: #{tpu_custom_call.1} parent=87 // pred_fallthru
          _
        // Predicated region
        $region101: #{tpu_custom_call.1} parent=87 // pred_check
          %p647 = pneg %p123
        $region102: #{tpu_custom_call.1} parent=87 // pred_check_branch
          %649 = sbr.rel (%p647) target = $region104
        $region103: #{tpu_custom_call.1} parent=87 // pred_region
          %651 = dma.done [#allocation9], 16
        $region104: #{tpu_custom_call.1} parent=87 // pred_fallthru
          _
        // Predicated region
        $region105: #{tpu_custom_call.1} parent=87 // pred_check
          %p652 = pneg %p170
        $region106: #{tpu_custom_call.1} parent=87 // pred_check_branch
          %654 = sbr.rel (%p652) target = $region108
        $region107: #{tpu_custom_call.1} parent=87 // pred_region
          %656 = dma.done [#allocation9], 6144
        $region108: #{tpu_custom_call.1} parent=87 // pred_fallthru
          _
        // Predicated region
        $region109: #{tpu_custom_call.1} parent=87 // pred_check
          %p657 = pneg %p191
        $region110: #{tpu_custom_call.1} parent=87 // pred_check_branch
          %659 = sbr.rel (%p657) target = $region112
        $region111: #{tpu_custom_call.1} parent=87 // pred_region
          %661 = dma.done [#allocation12], 96
        $region112: #{tpu_custom_call.1} parent=87 // pred_fallthru
          _
        // Predicated region
        $region113: #{tpu_custom_call.1} parent=87 // pred_check
          %p662 = pneg %p212
        $region114: #{tpu_custom_call.1} parent=87 // pred_check_branch
          %664 = sbr.rel (%p662) target = $region116
        $region115: #{tpu_custom_call.1} parent=87 // pred_region
          %666 = dma.done [#allocation12], 2048
        $region116: #{tpu_custom_call.1} parent=87 // pred_fallthru
          _
        // Predicated region
        $region117: #{tpu_custom_call.1} parent=87 // pred_check
          %p667 = pneg %p233
        $region118: #{tpu_custom_call.1} parent=87 // pred_check_branch
          %669 = sbr.rel (%p667) target = $region120
        $region119: #{tpu_custom_call.1} parent=87 // pred_region
          %671 = dma.done [#allocation15], 32
        $region120: #{tpu_custom_call.1} parent=87 // pred_fallthru
          _
        // Predicated region
        $region121: #{tpu_custom_call.1} parent=87 // pred_check
          %p672 = pneg %p275
        $region122: #{tpu_custom_call.1} parent=87 // pred_check_branch
          %674 = sbr.rel (%p672) target = $region124
        $region123: #{tpu_custom_call.1} parent=87 // pred_region
          %676 = dma.done [#allocation15], 32
        $region124: #{tpu_custom_call.1} parent=87 // pred_fallthru
          _
        // Predicated region
        $region125: #{tpu_custom_call.1} parent=87 // pred_check
          %p677 = pneg %p296
        $region126: #{tpu_custom_call.1} parent=87 // pred_check_branch
          %679 = sbr.rel (%p677) target = $region128
        $region127: #{tpu_custom_call.1} parent=87 // pred_region
          %681 = dma.done [#allocation18], 4096
        $region128: #{tpu_custom_call.1} parent=87 // pred_fallthru
          _
        // Predicated region
        $region129: #{tpu_custom_call.1} parent=87 // pred_check
          %p682 = pneg %p338
        $region130: #{tpu_custom_call.1} parent=87 // pred_check_branch
          %684 = sbr.rel (%p682) target = $region132
        $region131: #{tpu_custom_call.1} parent=87 // pred_region
          %686 = dma.done [#allocation18], 4096
        $region132: #{tpu_custom_call.1} parent=87 // pred_fallthru
          _
        %s687 = sand.u32 %s47, 1
        %s688 = scalar_lea.sflag [#allocation3], %s687
        %s689 = sand.u32 %s47, 1
        %s690 = smul.addr %s689, 4
        %s691 = scalar_lea.vmem [#allocation2], %s690
        %p692 = pneg %p60
        %p693 = pneg %p57
        %p694 = pneg %p81
        %p695 = pneg %p78
        %p696 = pneg %p102
        %p697 = pneg %p99
        %p698 = pneg %p123
        %p699 = pneg %p120
        %p700 = scmp.lt.s32.totalorder %s39, 1
        %s701 = scalar_select %p700, %s39, 1
        %s702 = scalar_lea.vmem %s4, %s701
        %p703 = pneg %p149
        %p704 = pneg %p146
        %p705 = pneg %p170
        %p706 = pneg %p167
        %p707 = pneg %p191
        %p708 = pneg %p188
        %p709 = pneg %p212
        %p710 = pneg %p209
        %p711 = pneg %p233
        %p712 = pneg %p230
        %p713 = pneg %p254
        %p714 = pneg %p251
        %p715 = pneg %p275
        %p716 = pneg %p272
        %p717 = pneg %p296
        %p718 = pneg %p293
        %p719 = pneg %p317
        %p720 = pneg %p314
        %p721 = pneg %p338
        %p722 = pneg %p335
        %p723 = pneg %p359
        %p724 = pneg %p356
        %p725 = pneg %p380
        %p726 = pneg %p377
        %p727 = pneg %p401
        %p728 = pneg %p398
        %p729 = pneg %p427
        %p730 = pneg %p424
        %s731 = sand.u32 %s414, 1
        %s732 = scalar_lea.sflag [#allocation4], %s731
        %s733 = sand.u32 %s414, 1
        %s734 = smul.addr %s733, 8
        %s735 = scalar_lea.vmem [#allocation20], %s734
        %p736 = scmp.lt.s32.totalorder %s39, 1
        %s737 = scalar_select %p736, %s39, 1
        %s738 = scalar_lea.vmem %s4, %s737
        %v740 = vld [vmem:[%s631] sm:$0xf]
        %v741 = vunpack.c.l.bf16 %v740
        %v742 = vld [vmem:[#allocation5] sm:$0xf]
        %v743 = vunpack.c.l.bf16 %v742
        %v744 = vadd.f32 %v741, %v743
        %v745 = vld [vmem:[#allocation7] sm:$0x1]
        %v746 = vld [vmem:[#allocation8] sm:$0x1]
        %747 = vadd.xlane.f32.xlu0 %v744
        %v748 = vpop.xlane.xlu0 %747
        %v749 = vrcp.pop 128.0
        %v750 = vmul.f32 128.0, %v749
        %v751 = vsub.f32 1.0, %v750
        %v752 = vmul.f32 %v749, %v751
        %v753 = vadd.f32 %v749, %v752
        %vm754 = vweird.f32 %v749
        %v755 = vsel %vm754, %v749, %v753
        %v756 = vmul.f32 %v748, %v755
        %v757 = vsub.f32 %v744, %v756
        %v758 = vmul.f32 %v757, %v757
        %759 = vadd.xlane.f32.xlu0 %v758
        %v760 = vpop.xlane.xlu0 %759
        %v761 = vmul.f32 %v760, %v755
        %v762 = vadd.f32 %v761, 1e-05
        %v763 = vrsqrt.pop %v762
        %v764 = vmul.f32 %v763, %v762
        %v765 = vmul.f32 %v764, %v763
        %v766 = vmul.f32 0.5, %v765
        %v767 = vsub.f32 1.5, %v766
        %v768 = vmul.f32 %v763, %v767
        %vm769 = vweird.f32 %v762
        %vm770 = vweird.f32 %v763
        %vm771 = vmor %vm769, %vm770
        %v772 = vsel %vm771, %v763, %v768
        %v773 = vmul.f32 %v757, %v772
        %v775 = vperm.slane %v745, 0
        %v777 = vmul.f32 %v773, %v775
        %v779 = vperm.slane %v746, 0
        %v781 = vadd.f32 %v777, %v779
        %v782 = vld [vmem:[%s738] sm:$0x1]
        loop: start=0, step=1, limit=2
        $region133: #{tpu_custom_call.1} parent=87 // loop_pre_header
          _
        $region134: #{tpu_custom_call.1} parent=87 // loop_header
          %s784 = sphi 0, %s788
          %p785 = scmp.ge.s32.totalorder %s784, 2
          %v789 = vphi %v781, %v2182
        $region135: #{tpu_custom_call.1} parent=87 // loop_header_branch
          %787 = sbr.rel (%p785) target = $region139
        $region136: #{tpu_custom_call.1} parent=87 // loop_body
          %s790 = smul.u32 %s784, 48
          %s791 = smul.addr %s790, 4
          %s792 = scalar_lea.vmem [#allocation10], %s791
          %v793 = vld [vmem:[%s792] sm:$0xff]
          %v794 = vld [vmem:[%s792 + $0x8] sm:$0xf]
          %v795 = vld [vmem:[%s792 + $0xc] sm:$0xff]
          %v796 = vld [vmem:[%s792 + $0x14] sm:$0xf]
          %v797 = vld [vmem:[%s792 + $0x18] sm:$0xff]
          %v798 = vld [vmem:[%s792 + $0x20] sm:$0xf]
          %v799 = vld [vmem:[%s792 + $0x24] sm:$0xff]
          %v800 = vld [vmem:[%s792 + $0x2c] sm:$0xf]
          %v801 = vld [vmem:[%s792 + $0x30] sm:$0xff]
          %v802 = vld [vmem:[%s792 + $0x38] sm:$0xf]
          %v803 = vld [vmem:[%s792 + $0x3c] sm:$0xff]
          %v804 = vld [vmem:[%s792 + $0x44] sm:$0xf]
          %v805 = vld [vmem:[%s792 + $0x48] sm:$0xff]
          %v806 = vld [vmem:[%s792 + $0x50] sm:$0xf]
          %v807 = vld [vmem:[%s792 + $0x54] sm:$0xff]
          %v808 = vld [vmem:[%s792 + $0x5c] sm:$0xf]
          %v809 = vld [vmem:[%s792 + $0x60] sm:$0xff]
          %v810 = vld [vmem:[%s792 + $0x68] sm:$0xf]
          %v811 = vld [vmem:[%s792 + $0x6c] sm:$0xff]
          %v812 = vld [vmem:[%s792 + $0x74] sm:$0xf]
          %v813 = vld [vmem:[%s792 + $0x78] sm:$0xff]
          %v814 = vld [vmem:[%s792 + $0x80] sm:$0xf]
          %v815 = vld [vmem:[%s792 + $0x84] sm:$0xff]
          %v816 = vld [vmem:[%s792 + $0x8c] sm:$0xf]
          %v817 = vld [vmem:[%s792 + $0x90] sm:$0xff]
          %v818 = vld [vmem:[%s792 + $0x98] sm:$0xf]
          %v819 = vld [vmem:[%s792 + $0x9c] sm:$0xff]
          %v820 = vld [vmem:[%s792 + $0xa4] sm:$0xf]
          %v821 = vld [vmem:[%s792 + $0xa8] sm:$0xff]
          %v822 = vld [vmem:[%s792 + $0xb0] sm:$0xf]
          %v823 = vld [vmem:[%s792 + $0xb4] sm:$0xff]
          %v824 = vld [vmem:[%s792 + $0xbc] sm:$0xf]
          %s825 = smul.u32 %s784, 3
          %s826 = scalar_lea.vmem [#allocation11], %s825
          %v827 = vld [vmem:[%s826] sm:$0x7]
          %s828 = smul.u32 %s784, 16
          %s829 = smul.addr %s828, 4
          %s830 = scalar_lea.vmem [#allocation13], %s829
          %v831 = vld [vmem:[%s830] sm:$0xf]
          %v832 = vld [vmem:[%s830 + $0x4] sm:$0xf]
          %v833 = vld [vmem:[%s830 + $0x8] sm:$0xf]
          %v834 = vld [vmem:[%s830 + $0xc] sm:$0xf]
          %v835 = vld [vmem:[%s830 + $0x10] sm:$0xf]
          %v836 = vld [vmem:[%s830 + $0x14] sm:$0xf]
          %v837 = vld [vmem:[%s830 + $0x18] sm:$0xf]
          %v838 = vld [vmem:[%s830 + $0x1c] sm:$0xf]
          %v839 = vld [vmem:[%s830 + $0x20] sm:$0xf]
          %v840 = vld [vmem:[%s830 + $0x24] sm:$0xf]
          %v841 = vld [vmem:[%s830 + $0x28] sm:$0xf]
          %v842 = vld [vmem:[%s830 + $0x2c] sm:$0xf]
          %v843 = vld [vmem:[%s830 + $0x30] sm:$0xf]
          %v844 = vld [vmem:[%s830 + $0x34] sm:$0xf]
          %v845 = vld [vmem:[%s830 + $0x38] sm:$0xf]
          %v846 = vld [vmem:[%s830 + $0x3c] sm:$0xf]
          %s847 = scalar_lea.vmem [#allocation14], %s784
          %v848 = vld [vmem:[%s847] sm:$0x1]
          %s849 = scalar_lea.vmem %s9, %s784
          %v850 = vld [vmem:[%s849] sm:$0x1]
          %s851 = scalar_lea.vmem [#allocation16], %s784
          %v852 = vld [vmem:[%s851] sm:$0x1]
          %s853 = smul.u32 %s784, 32
          %s854 = smul.addr %s853, 4
          %s855 = scalar_lea.vmem [#allocation17], %s854
          %v856 = vld [vmem:[%s855] sm:$0xff]
          %v857 = vld [vmem:[%s855 + $0x8] sm:$0xff]
          %v858 = vld [vmem:[%s855 + $0x10] sm:$0xff]
          %v859 = vld [vmem:[%s855 + $0x18] sm:$0xff]
          %v860 = vld [vmem:[%s855 + $0x20] sm:$0xff]
          %v861 = vld [vmem:[%s855 + $0x28] sm:$0xff]
          %v862 = vld [vmem:[%s855 + $0x30] sm:$0xff]
          %v863 = vld [vmem:[%s855 + $0x38] sm:$0xff]
          %v864 = vld [vmem:[%s855 + $0x40] sm:$0xff]
          %v865 = vld [vmem:[%s855 + $0x48] sm:$0xff]
          %v866 = vld [vmem:[%s855 + $0x50] sm:$0xff]
          %v867 = vld [vmem:[%s855 + $0x58] sm:$0xff]
          %v868 = vld [vmem:[%s855 + $0x60] sm:$0xff]
          %v869 = vld [vmem:[%s855 + $0x68] sm:$0xff]
          %v870 = vld [vmem:[%s855 + $0x70] sm:$0xff]
          %v871 = vld [vmem:[%s855 + $0x78] sm:$0xff]
          %s872 = smul.u32 %s784, 2
          %s873 = scalar_lea.vmem %s12, %s872
          %v874 = vld [vmem:[%s873] sm:$0x3]
          %s875 = smul.addr %s853, 4
          %s876 = scalar_lea.vmem [#allocation19], %s875
          %v877 = vld [vmem:[%s876] sm:$0xf]
          %v878 = vld [vmem:[%s876 + $0x4] sm:$0xf]
          %v879 = vld [vmem:[%s876 + $0x8] sm:$0xf]
          %v880 = vld [vmem:[%s876 + $0xc] sm:$0xf]
          %v881 = vld [vmem:[%s876 + $0x10] sm:$0xf]
          %v882 = vld [vmem:[%s876 + $0x14] sm:$0xf]
          %v883 = vld [vmem:[%s876 + $0x18] sm:$0xf]
          %v884 = vld [vmem:[%s876 + $0x1c] sm:$0xf]
          %v885 = vld [vmem:[%s876 + $0x20] sm:$0xf]
          %v886 = vld [vmem:[%s876 + $0x24] sm:$0xf]
          %v887 = vld [vmem:[%s876 + $0x28] sm:$0xf]
          %v888 = vld [vmem:[%s876 + $0x2c] sm:$0xf]
          %v889 = vld [vmem:[%s876 + $0x30] sm:$0xf]
          %v890 = vld [vmem:[%s876 + $0x34] sm:$0xf]
          %v891 = vld [vmem:[%s876 + $0x38] sm:$0xf]
          %v892 = vld [vmem:[%s876 + $0x3c] sm:$0xf]
          %v893 = vld [vmem:[%s876 + $0x40] sm:$0xf]
          %v894 = vld [vmem:[%s876 + $0x44] sm:$0xf]
          %v895 = vld [vmem:[%s876 + $0x48] sm:$0xf]
          %v896 = vld [vmem:[%s876 + $0x4c] sm:$0xf]
          %v897 = vld [vmem:[%s876 + $0x50] sm:$0xf]
          %v898 = vld [vmem:[%s876 + $0x54] sm:$0xf]
          %v899 = vld [vmem:[%s876 + $0x58] sm:$0xf]
          %v900 = vld [vmem:[%s876 + $0x5c] sm:$0xf]
          %v901 = vld [vmem:[%s876 + $0x60] sm:$0xf]
          %v902 = vld [vmem:[%s876 + $0x64] sm:$0xf]
          %v903 = vld [vmem:[%s876 + $0x68] sm:$0xf]
          %v904 = vld [vmem:[%s876 + $0x6c] sm:$0xf]
          %v905 = vld [vmem:[%s876 + $0x70] sm:$0xf]
          %v906 = vld [vmem:[%s876 + $0x74] sm:$0xf]
          %v907 = vld [vmem:[%s876 + $0x78] sm:$0xf]
          %v908 = vld [vmem:[%s876 + $0x7c] sm:$0xf]
          %s909 = scalar_lea.vmem %s14, %s784
          %v910 = vld [vmem:[%s909] sm:$0x1]
          %s911 = scalar_lea.vmem %s15, %s784
          %v912 = vld [vmem:[%s911] sm:$0x1]
          %s913 = scalar_lea.vmem %s16, %s784
          %v914 = vld [vmem:[%s913] sm:$0x1]
          %v915 = vpack.c.bf16 %v789, %v789
          %v917 = vperm.slane %v827, 0
          %v918 = vperm.slane %v827, 1
          %v919 = vperm.slane %v827, 2
          %v955 = vunpack.c.l.b16 %v793
          %v956 = vunpack.c.h.b16 %v793
          %v957 = vunpack.c.l.b16 %v794
          %v958 = vunpack.c.l.b16 %v795
          %v959 = vunpack.c.h.b16 %v795
          %v960 = vunpack.c.l.b16 %v796
          %v961 = vunpack.c.l.b16 %v797
          %v962 = vunpack.c.h.b16 %v797
          %v963 = vunpack.c.l.b16 %v798
          %v964 = vunpack.c.l.b16 %v799
          %v965 = vunpack.c.h.b16 %v799
          %v966 = vunpack.c.l.b16 %v800
          %v967 = vunpack.c.l.b16 %v801
          %v968 = vunpack.c.h.b16 %v801
          %v969 = vunpack.c.l.b16 %v802
          %v970 = vunpack.c.l.b16 %v803
          %v971 = vunpack.c.h.b16 %v803
          %v972 = vunpack.c.l.b16 %v804
          %v973 = vunpack.c.l.b16 %v805
          %v974 = vunpack.c.h.b16 %v805
          %v975 = vunpack.c.l.b16 %v806
          %v976 = vunpack.c.l.b16 %v807
          %v977 = vunpack.c.h.b16 %v807
          %v978 = vunpack.c.l.b16 %v808
          %v979 = vunpack.c.l.b16 %v809
          %v980 = vunpack.c.h.b16 %v809
          %v981 = vunpack.c.l.b16 %v810
          %v982 = vunpack.c.l.b16 %v811
          %v983 = vunpack.c.h.b16 %v811
          %v984 = vunpack.c.l.b16 %v812
          %v985 = vunpack.c.l.b16 %v813
          %v986 = vunpack.c.h.b16 %v813
          %v987 = vunpack.c.l.b16 %v814
          %v988 = vunpack.c.l.b16 %v815
          %v989 = vunpack.c.h.b16 %v815
          %v990 = vunpack.c.l.b16 %v816
          %v991 = vunpack.c.l.b16 %v817
          %v992 = vunpack.c.h.b16 %v817
          %v993 = vunpack.c.l.b16 %v818
          %v994 = vunpack.c.l.b16 %v819
          %v995 = vunpack.c.h.b16 %v819
          %v996 = vunpack.c.l.b16 %v820
          %v997 = vunpack.c.l.b16 %v821
          %v998 = vunpack.c.h.b16 %v821
          %v999 = vunpack.c.l.b16 %v822
          %v1000 = vunpack.c.l.b16 %v823
          %v1001 = vunpack.c.h.b16 %v823
          %v1002 = vunpack.c.l.b16 %v824
          %v1003 = vpack.c.b16 %v958, %v955
          %v1004 = vpack.c.b16 %v959, %v956
          %v1005 = vpack.c.b16 %v960, %v957
          %v1006 = vpack.c.b16 %v964, %v961
          %v1007 = vpack.c.b16 %v965, %v962
          %v1008 = vpack.c.b16 %v966, %v963
          %v1009 = vpack.c.b16 %v970, %v967
          %v1010 = vpack.c.b16 %v971, %v968
          %v1011 = vpack.c.b16 %v972, %v969
          %v1012 = vpack.c.b16 %v976, %v973
          %v1013 = vpack.c.b16 %v977, %v974
          %v1014 = vpack.c.b16 %v978, %v975
          %v1015 = vpack.c.b16 %v982, %v979
          %v1016 = vpack.c.b16 %v983, %v980
          %v1017 = vpack.c.b16 %v984, %v981
          %v1018 = vpack.c.b16 %v988, %v985
          %v1019 = vpack.c.b16 %v989, %v986
          %v1020 = vpack.c.b16 %v990, %v987
          %v1021 = vpack.c.b16 %v994, %v991
          %v1022 = vpack.c.b16 %v995, %v992
          %v1023 = vpack.c.b16 %v996, %v993
          %v1024 = vpack.c.b16 %v1000, %v997
          %v1025 = vpack.c.b16 %v1001, %v998
          %v1026 = vpack.c.b16 %v1002, %v999
          %1051 = vmatpush.bf16.msra.mxu0 %v1024
          %1052 = vmatpush.bf16.msra.mxu0 %v1021
          %1053 = vmatpush.bf16.msra.mxu0 %v1018
          %1054 = vmatpush.bf16.msra.mxu0 %v1015
          %1055 = vmatpush.bf16.msra.mxu0 %v1012
          %1056 = vmatpush.bf16.msra.mxu0 %v1009
          %1057 = vmatpush.bf16.msra.mxu0 %v1006
          %1058 = vmatpush.bf16.msra.mxu0 %v1003
          %1059 = vmatmul.bf16.gmra.mxu0 %v915
          %v1060 = vpop.f32.mrf.mxu0
          %v1061 = vadd.f32 %v917, %v1060
          %v1062 = vpop.f32.mrf.mxu0
          %1063 = vdwg.mxu0
          %1064 = vmatpush.bf16.msra.mxu0 %v1025
          %1065 = vmatpush.bf16.msra.mxu0 %v1022
          %1066 = vmatpush.bf16.msra.mxu0 %v1019
          %1067 = vmatpush.bf16.msra.mxu0 %v1016
          %1068 = vmatpush.bf16.msra.mxu0 %v1013
          %1069 = vmatpush.bf16.msra.mxu0 %v1010
          %1070 = vmatpush.bf16.msra.mxu0 %v1007
          %1071 = vmatpush.bf16.msra.mxu0 %v1004
          %1072 = vmatmul.bf16.gmra.mxu0 %v915
          %v1073 = vpop.f32.mrf.mxu0
          %v1074 = vadd.f32 %v918, %v1073
          %v1075 = vpop.f32.mrf.mxu0
          %1076 = vdwg.mxu0
          %1077 = vmatpush.bf16.msra.mxu0 %v1026
          %1078 = vmatpush.bf16.msra.mxu0 %v1023
          %1079 = vmatpush.bf16.msra.mxu0 %v1020
          %1080 = vmatpush.bf16.msra.mxu0 %v1017
          %1081 = vmatpush.bf16.msra.mxu0 %v1014
          %1082 = vmatpush.bf16.msra.mxu0 %v1011
          %1083 = vmatpush.bf16.msra.mxu0 %v1008
          %1084 = vmatpush.bf16.msra.mxu0 %v1005
          %1085 = vmatmul.bf16.gmra.mxu0 %v915
          %v1086 = vpop.f32.mrf.mxu0
          %v1087 = vadd.f32 %v919, %v1086
          %v1088 = vpop.f32.mrf.mxu0
          %1089 = vdwg.mxu0
          %v1090 = vmul.f32 %v1061, 0.17677669
          %v1091 = vpack.c.bf16 %v1090, %v1090
          %v1092 = vpack.c.bf16 %v1074, %v1074
          %v1093 = vpack.c.bf16 %v1087, %v1087
          %1095 = vrot.lane.b32.xlu0 %v1091, 96
          %v1096 = vpop.permute.xlu0 %1095
          %1097 = vrot.lane.b32.xlu0 %v1091, 64
          %v1098 = vpop.permute.xlu0 %1097
          %1099 = vrot.lane.b32.xlu0 %v1091, 32
          %v1100 = vpop.permute.xlu0 %1099
          %v1103 = vpack.i.b16 %v1096, %v1091
          %v1104 = vshrl.u32 %v1091, 16
          %v1105 = vshrl.u32 %v1096, 16
          %v1106 = vpack.i.b16 %v1105, %v1104
          %v1109 = vpack.i.b16 %v1100, %v1098
          %v1110 = vshrl.u32 %v1098, 16
          %v1111 = vshrl.u32 %v1100, 16
          %v1112 = vpack.i.b16 %v1111, %v1110
          %v1115 = vunpack.c.l.s4 1983009808
          %v1116 = vunpack.c.0.s8 %v1115
          %v1117 = vperm.slane %v1103, %v1116
          %v1120 = vunpack.c.l.s4 1983009808
          %v1121 = vunpack.c.0.s8 %v1120
          %v1122 = vperm.slane %v1109, %v1121
          %v1123 = vrot.slane %v1122, 4
          %vm1124 = vcmask 1047556
          %v1125 = vsel %vm1124, %v1123, %v1117
          %v1126 = vrot.slane %v1117, 4
          %v1127 = vsel %vm1124, %v1122, %v1126
          %v1129 = vunpack.c.l.s4 1934713408
          %v1130 = vunpack.c.0.s8 %v1129
          %v1131 = vperm.slane %v1125, %v1130
          %v1133 = vunpack.c.l.s4 1934713408
          %v1134 = vunpack.c.0.s8 %v1133
          %v1135 = vperm.slane %v1127, %v1134
          %v1136 = vrot.slane %v1131, 4
          %v1137 = vsel %vm1124, 0, %v1136
          %v1138 = vrot.slane %v1135, 4
          %v1139 = vsel %vm1124, 0, %v1138
          %v1142 = vunpack.c.l.s4 1983009808
          %v1143 = vunpack.c.0.s8 %v1142
          %v1144 = vperm.slane %v1106, %v1143
          %v1147 = vunpack.c.l.s4 1983009808
          %v1148 = vunpack.c.0.s8 %v1147
          %v1149 = vperm.slane %v1112, %v1148
          %v1150 = vrot.slane %v1149, 4
          %v1151 = vsel %vm1124, %v1150, %v1144
          %v1152 = vrot.slane %v1144, 4
          %v1153 = vsel %vm1124, %v1149, %v1152
          %v1155 = vunpack.c.l.s4 1934713408
          %v1156 = vunpack.c.0.s8 %v1155
          %v1157 = vperm.slane %v1151, %v1156
          %v1159 = vunpack.c.l.s4 1934713408
          %v1160 = vunpack.c.0.s8 %v1159
          %v1161 = vperm.slane %v1153, %v1160
          %v1162 = vrot.slane %v1157, 4
          %v1163 = vsel %vm1124, 0, %v1162
          %v1164 = vrot.slane %v1161, 4
          %v1165 = vsel %vm1124, 0, %v1164
          %v1166 = vsel %vm1124, %v1138, %v1131
          %v1168 = vunpack.c.l.s4 1983009808
          %v1169 = vunpack.c.0.s8 %v1168
          %v1170 = vperm.slane %v1166, %v1169
          %v1171 = vrot.slane %v1139, 4
          %v1172 = vsel %vm1124, %v1171, %v1137
          %v1174 = vunpack.c.l.s4 1983009808
          %v1175 = vunpack.c.0.s8 %v1174
          %v1176 = vperm.slane %v1172, %v1175
          %v1177 = vrot.slane %v1176, 4
          %v1178 = vsel %vm1124, %v1177, %v1170
          %v1180 = vunpack.c.l.s4 1934713408
          %v1181 = vunpack.c.0.s8 %v1180
          %v1182 = vperm.slane %v1178, %v1181
          %v1183 = vrot.slane %v1182, 4
          %v1184 = vsel %vm1124, 0, %v1183
          %v1185 = vsel %vm1124, %v1164, %v1157
          %v1187 = vunpack.c.l.s4 1983009808
          %v1188 = vunpack.c.0.s8 %v1187
          %v1189 = vperm.slane %v1185, %v1188
          %v1190 = vrot.slane %v1165, 4
          %v1191 = vsel %vm1124, %v1190, %v1163
          %v1193 = vunpack.c.l.s4 1983009808
          %v1194 = vunpack.c.0.s8 %v1193
          %v1195 = vperm.slane %v1191, %v1194
          %v1196 = vrot.slane %v1195, 4
          %v1197 = vsel %vm1124, %v1196, %v1189
          %v1199 = vunpack.c.l.s4 1934713408
          %v1200 = vunpack.c.0.s8 %v1199
          %v1201 = vperm.slane %v1197, %v1200
          %v1202 = vrot.slane %v1201, 4
          %v1203 = vsel %vm1124, 0, %v1202
          %v1206 = vpack.i.b16 %v1201, %v1182
          %v1207 = vshrl.u32 %v1182, 16
          %v1208 = vshrl.u32 %v1201, 16
          %v1209 = vpack.i.b16 %v1208, %v1207
          %v1212 = vpack.i.b16 %v1203, %v1184
          %v1213 = vshrl.u32 %v1184, 16
          %v1214 = vshrl.u32 %v1203, 16
          %v1215 = vpack.i.b16 %v1214, %v1213
          %1217 = vrot.lane.b32.xlu0 %v1092, 96
          %v1218 = vpop.permute.xlu0 %1217
          %1219 = vrot.lane.b32.xlu0 %v1092, 64
          %v1220 = vpop.permute.xlu0 %1219
          %1221 = vrot.lane.b32.xlu0 %v1092, 32
          %v1222 = vpop.permute.xlu0 %1221
          %v1225 = vpack.i.b16 %v1218, %v1092
          %v1226 = vshrl.u32 %v1092, 16
          %v1227 = vshrl.u32 %v1218, 16
          %v1228 = vpack.i.b16 %v1227, %v1226
          %v1231 = vpack.i.b16 %v1222, %v1220
          %v1232 = vshrl.u32 %v1220, 16
          %v1233 = vshrl.u32 %v1222, 16
          %v1234 = vpack.i.b16 %v1233, %v1232
          %v1237 = vunpack.c.l.s4 1983009808
          %v1238 = vunpack.c.0.s8 %v1237
          %v1239 = vperm.slane %v1225, %v1238
          %v1242 = vunpack.c.l.s4 1983009808
          %v1243 = vunpack.c.0.s8 %v1242
          %v1244 = vperm.slane %v1231, %v1243
          %v1245 = vrot.slane %v1244, 4
          %v1246 = vsel %vm1124, %v1245, %v1239
          %v1247 = vrot.slane %v1239, 4
          %v1248 = vsel %vm1124, %v1244, %v1247
          %v1250 = vunpack.c.l.s4 1934713408
          %v1251 = vunpack.c.0.s8 %v1250
          %v1252 = vperm.slane %v1246, %v1251
          %v1254 = vunpack.c.l.s4 1934713408
          %v1255 = vunpack.c.0.s8 %v1254
          %v1256 = vperm.slane %v1248, %v1255
          %v1257 = vrot.slane %v1252, 4
          %v1258 = vsel %vm1124, 0, %v1257
          %v1259 = vrot.slane %v1256, 4
          %v1260 = vsel %vm1124, 0, %v1259
          %v1263 = vunpack.c.l.s4 1983009808
          %v1264 = vunpack.c.0.s8 %v1263
          %v1265 = vperm.slane %v1228, %v1264
          %v1268 = vunpack.c.l.s4 1983009808
          %v1269 = vunpack.c.0.s8 %v1268
          %v1270 = vperm.slane %v1234, %v1269
          %v1271 = vrot.slane %v1270, 4
          %v1272 = vsel %vm1124, %v1271, %v1265
          %v1273 = vrot.slane %v1265, 4
          %v1274 = vsel %vm1124, %v1270, %v1273
          %v1276 = vunpack.c.l.s4 1934713408
          %v1277 = vunpack.c.0.s8 %v1276
          %v1278 = vperm.slane %v1272, %v1277
          %v1280 = vunpack.c.l.s4 1934713408
          %v1281 = vunpack.c.0.s8 %v1280
          %v1282 = vperm.slane %v1274, %v1281
          %v1283 = vrot.slane %v1278, 4
          %v1284 = vsel %vm1124, 0, %v1283
          %v1285 = vrot.slane %v1282, 4
          %v1286 = vsel %vm1124, 0, %v1285
          %v1287 = vsel %vm1124, %v1259, %v1252
          %v1289 = vunpack.c.l.s4 1983009808
          %v1290 = vunpack.c.0.s8 %v1289
          %v1291 = vperm.slane %v1287, %v1290
          %v1292 = vrot.slane %v1260, 4
          %v1293 = vsel %vm1124, %v1292, %v1258
          %v1295 = vunpack.c.l.s4 1983009808
          %v1296 = vunpack.c.0.s8 %v1295
          %v1297 = vperm.slane %v1293, %v1296
          %v1298 = vrot.slane %v1297, 4
          %v1299 = vsel %vm1124, %v1298, %v1291
          %v1301 = vunpack.c.l.s4 1934713408
          %v1302 = vunpack.c.0.s8 %v1301
          %v1303 = vperm.slane %v1299, %v1302
          %v1304 = vrot.slane %v1303, 4
          %v1305 = vsel %vm1124, 0, %v1304
          %v1306 = vsel %vm1124, %v1285, %v1278
          %v1308 = vunpack.c.l.s4 1983009808
          %v1309 = vunpack.c.0.s8 %v1308
          %v1310 = vperm.slane %v1306, %v1309
          %v1311 = vrot.slane %v1286, 4
          %v1312 = vsel %vm1124, %v1311, %v1284
          %v1314 = vunpack.c.l.s4 1983009808
          %v1315 = vunpack.c.0.s8 %v1314
          %v1316 = vperm.slane %v1312, %v1315
          %v1317 = vrot.slane %v1316, 4
          %v1318 = vsel %vm1124, %v1317, %v1310
          %v1320 = vunpack.c.l.s4 1934713408
          %v1321 = vunpack.c.0.s8 %v1320
          %v1322 = vperm.slane %v1318, %v1321
          %v1323 = vrot.slane %v1322, 4
          %v1324 = vsel %vm1124, 0, %v1323
          %v1327 = vpack.i.b16 %v1322, %v1303
          %v1328 = vshrl.u32 %v1303, 16
          %v1329 = vshrl.u32 %v1322, 16
          %v1330 = vpack.i.b16 %v1329, %v1328
          %v1333 = vpack.i.b16 %v1324, %v1305
          %v1334 = vshrl.u32 %v1305, 16
          %v1335 = vshrl.u32 %v1324, 16
          %v1336 = vpack.i.b16 %v1335, %v1334
          %1338 = vrot.lane.b32.xlu0 %v1093, 96
          %v1339 = vpop.permute.xlu0 %1338
          %1340 = vrot.lane.b32.xlu0 %v1093, 64
          %v1341 = vpop.permute.xlu0 %1340
          %1342 = vrot.lane.b32.xlu0 %v1093, 32
          %v1343 = vpop.permute.xlu0 %1342
          %v1346 = vpack.i.b16 %v1339, %v1093
          %v1347 = vshrl.u32 %v1093, 16
          %v1348 = vshrl.u32 %v1339, 16
          %v1349 = vpack.i.b16 %v1348, %v1347
          %v1352 = vpack.i.b16 %v1343, %v1341
          %v1353 = vshrl.u32 %v1341, 16
          %v1354 = vshrl.u32 %v1343, 16
          %v1355 = vpack.i.b16 %v1354, %v1353
          %v1358 = vunpack.c.l.s4 1983009808
          %v1359 = vunpack.c.0.s8 %v1358
          %v1360 = vperm.slane %v1346, %v1359
          %v1363 = vunpack.c.l.s4 1983009808
          %v1364 = vunpack.c.0.s8 %v1363
          %v1365 = vperm.slane %v1352, %v1364
          %v1366 = vrot.slane %v1365, 4
          %v1367 = vsel %vm1124, %v1366, %v1360
          %v1368 = vrot.slane %v1360, 4
          %v1369 = vsel %vm1124, %v1365, %v1368
          %v1371 = vunpack.c.l.s4 1934713408
          %v1372 = vunpack.c.0.s8 %v1371
          %v1373 = vperm.slane %v1367, %v1372
          %v1375 = vunpack.c.l.s4 1934713408
          %v1376 = vunpack.c.0.s8 %v1375
          %v1377 = vperm.slane %v1369, %v1376
          %v1378 = vrot.slane %v1373, 4
          %v1379 = vsel %vm1124, 0, %v1378
          %v1380 = vrot.slane %v1377, 4
          %v1381 = vsel %vm1124, 0, %v1380
          %v1384 = vunpack.c.l.s4 1983009808
          %v1385 = vunpack.c.0.s8 %v1384
          %v1386 = vperm.slane %v1349, %v1385
          %v1389 = vunpack.c.l.s4 1983009808
          %v1390 = vunpack.c.0.s8 %v1389
          %v1391 = vperm.slane %v1355, %v1390
          %v1392 = vrot.slane %v1391, 4
          %v1393 = vsel %vm1124, %v1392, %v1386
          %v1394 = vrot.slane %v1386, 4
          %v1395 = vsel %vm1124, %v1391, %v1394
          %v1397 = vunpack.c.l.s4 1934713408
          %v1398 = vunpack.c.0.s8 %v1397
          %v1399 = vperm.slane %v1393, %v1398
          %v1401 = vunpack.c.l.s4 1934713408
          %v1402 = vunpack.c.0.s8 %v1401
          %v1403 = vperm.slane %v1395, %v1402
          %v1404 = vrot.slane %v1399, 4
          %v1405 = vsel %vm1124, 0, %v1404
          %v1406 = vrot.slane %v1403, 4
          %v1407 = vsel %vm1124, 0, %v1406
          %v1408 = vsel %vm1124, %v1380, %v1373
          %v1410 = vunpack.c.l.s4 1983009808
          %v1411 = vunpack.c.0.s8 %v1410
          %v1412 = vperm.slane %v1408, %v1411
          %v1413 = vrot.slane %v1381, 4
          %v1414 = vsel %vm1124, %v1413, %v1379
          %v1416 = vunpack.c.l.s4 1983009808
          %v1417 = vunpack.c.0.s8 %v1416
          %v1418 = vperm.slane %v1414, %v1417
          %v1419 = vrot.slane %v1418, 4
          %v1420 = vsel %vm1124, %v1419, %v1412
          %v1422 = vunpack.c.l.s4 1934713408
          %v1423 = vunpack.c.0.s8 %v1422
          %v1424 = vperm.slane %v1420, %v1423
          %v1425 = vrot.slane %v1424, 4
          %v1426 = vsel %vm1124, 0, %v1425
          %v1427 = vsel %vm1124, %v1406, %v1399
          %v1429 = vunpack.c.l.s4 1983009808
          %v1430 = vunpack.c.0.s8 %v1429
          %v1431 = vperm.slane %v1427, %v1430
          %v1432 = vrot.slane %v1407, 4
          %v1433 = vsel %vm1124, %v1432, %v1405
          %v1435 = vunpack.c.l.s4 1983009808
          %v1436 = vunpack.c.0.s8 %v1435
          %v1437 = vperm.slane %v1433, %v1436
          %v1438 = vrot.slane %v1437, 4
          %v1439 = vsel %vm1124, %v1438, %v1431
          %v1441 = vunpack.c.l.s4 1934713408
          %v1442 = vunpack.c.0.s8 %v1441
          %v1443 = vperm.slane %v1439, %v1442
          %v1444 = vrot.slane %v1443, 4
          %v1445 = vsel %vm1124, 0, %v1444
          %v1448 = vpack.i.b16 %v1443, %v1424
          %v1449 = vshrl.u32 %v1424, 16
          %v1450 = vshrl.u32 %v1443, 16
          %v1451 = vpack.i.b16 %v1450, %v1449
          %v1454 = vpack.i.b16 %v1445, %v1426
          %v1455 = vshrl.u32 %v1426, 16
          %v1456 = vshrl.u32 %v1445, 16
          %v1457 = vpack.i.b16 %v1456, %v1455
          %v1459 = vperm.slane %v782, 0
          %vm1461 = vcmask 261120
          %v1463 = vsel %vm1461, %v1206, 0
          %v1466 = vsel %vm1461, %v1327, 0
          %1468 = vmatpush.bf16.xpose.msra.mxu0 0
          %1469 = vmatpush.bf16.xpose.msra.mxu0 0
          %1470 = vmatpush.bf16.xpose.msra.mxu0 0
          %1471 = vmatpush.bf16.xpose.msra.mxu0 0
          %1472 = vmatpush.bf16.xpose.msra.mxu0 0
          %1473 = vmatpush.bf16.xpose.msra.mxu0 0
          %1474 = vmatpush.bf16.xpose.msra.mxu0 0
          %1475 = vmatpush.bf16.xpose.msra.mxu0 %v1466
          %1476 = vmatmul.bf16.gmra.mxu0 %v1463
          %v1477 = vpop.f32.mrf.mxu0
          %v1478 = vadd.f32 %v1459, %v1477
          %v1479 = vpop.f32.mrf.mxu0
          %1480 = vdwg.mxu0
          %v1482 = vsel %vm1461, %v1209, 0
          %v1485 = vsel %vm1461, %v1330, 0
          %1487 = vmatpush.bf16.xpose.msra.mxu0 0
          %1488 = vmatpush.bf16.xpose.msra.mxu0 0
          %1489 = vmatpush.bf16.xpose.msra.mxu0 0
          %1490 = vmatpush.bf16.xpose.msra.mxu0 0
          %1491 = vmatpush.bf16.xpose.msra.mxu0 0
          %1492 = vmatpush.bf16.xpose.msra.mxu0 0
          %1493 = vmatpush.bf16.xpose.msra.mxu0 0
          %1494 = vmatpush.bf16.xpose.msra.mxu0 %v1485
          %1495 = vmatmul.bf16.gmra.mxu0 %v1482
          %v1496 = vpop.f32.mrf.mxu0
          %v1497 = vadd.f32 %v1459, %v1496
          %v1498 = vpop.f32.mrf.mxu0
          %1499 = vdwg.mxu0
          %v1501 = vsel %vm1461, %v1212, 0
          %v1504 = vsel %vm1461, %v1333, 0
          %1506 = vmatpush.bf16.xpose.msra.mxu0 0
          %1507 = vmatpush.bf16.xpose.msra.mxu0 0
          %1508 = vmatpush.bf16.xpose.msra.mxu0 0
          %1509 = vmatpush.bf16.xpose.msra.mxu0 0
          %1510 = vmatpush.bf16.xpose.msra.mxu0 0
          %1511 = vmatpush.bf16.xpose.msra.mxu0 0
          %1512 = vmatpush.bf16.xpose.msra.mxu0 0
          %1513 = vmatpush.bf16.xpose.msra.mxu0 %v1504
          %1514 = vmatmul.bf16.gmra.mxu0 %v1501
          %v1515 = vpop.f32.mrf.mxu0
          %v1516 = vadd.f32 %v1459, %v1515
          %v1517 = vpop.f32.mrf.mxu0
          %1518 = vdwg.mxu0
          %v1520 = vsel %vm1461, %v1215, 0
          %v1523 = vsel %vm1461, %v1336, 0
          %1525 = vmatpush.bf16.xpose.msra.mxu0 0
          %1526 = vmatpush.bf16.xpose.msra.mxu0 0
          %1527 = vmatpush.bf16.xpose.msra.mxu0 0
          %1528 = vmatpush.bf16.xpose.msra.mxu0 0
          %1529 = vmatpush.bf16.xpose.msra.mxu0 0
          %1530 = vmatpush.bf16.xpose.msra.mxu0 0
          %1531 = vmatpush.bf16.xpose.msra.mxu0 0
          %1532 = vmatpush.bf16.xpose.msra.mxu0 %v1523
          %1533 = vmatmul.bf16.gmra.mxu0 %v1520
          %v1534 = vpop.f32.mrf.mxu0
          %v1535 = vadd.f32 %v1459, %v1534
          %v1536 = vpop.f32.mrf.mxu0
          %1537 = vdwg.mxu0
          %vm1538 = vcmask 64512
          %v1539 = vsel %vm1538, %v1478, -inf
          %1540 = vmax.xlane.f32.xlu0 %v1539
          %v1541 = vpop.xlane.xlu0 %1540
          %v1542 = vsel %vm1538, %v1497, -inf
          %1543 = vmax.xlane.f32.xlu0 %v1542
          %v1544 = vpop.xlane.xlu0 %1543
          %v1545 = vsel %vm1538, %v1516, -inf
          %1546 = vmax.xlane.f32.xlu0 %v1545
          %v1547 = vpop.xlane.xlu0 %1546
          %v1548 = vsel %vm1538, %v1535, -inf
          %1549 = vmax.xlane.f32.xlu0 %v1548
          %v1550 = vpop.xlane.xlu0 %1549
          %v1551 = vsub.f32 %v1478, %v1541
          %v1552 = vsub.f32 %v1497, %v1544
          %v1553 = vsub.f32 %v1516, %v1547
          %v1554 = vsub.f32 %v1535, %v1550
          %v1555 = vmul.f32 %v1551, 1.442695
          %v1556 = vpow.pop %v1555
          %v1557 = vmul.f32 %v1552, 1.442695
          %v1558 = vpow.pop %v1557
          %v1559 = vmul.f32 %v1553, 1.442695
          %v1560 = vpow.pop %v1559
          %v1561 = vmul.f32 %v1554, 1.442695
          %v1562 = vpow.pop %v1561
          %v1563 = vsel %vm1538, %v1556, 0.0
          %1564 = vadd.xlane.f32.xlu0 %v1563
          %v1565 = vpop.xlane.xlu0 %1564
          %v1566 = vsel %vm1538, %v1558, 0.0
          %1567 = vadd.xlane.f32.xlu0 %v1566
          %v1568 = vpop.xlane.xlu0 %1567
          %v1569 = vsel %vm1538, %v1560, 0.0
          %1570 = vadd.xlane.f32.xlu0 %v1569
          %v1571 = vpop.xlane.xlu0 %1570
          %v1572 = vsel %vm1538, %v1562, 0.0
          %1573 = vadd.xlane.f32.xlu0 %v1572
          %v1574 = vpop.xlane.xlu0 %1573
          %v1575 = vrcp.pop %v1565
          %v1576 = vrcp.pop %v1568
          %v1577 = vrcp.pop %v1571
          %v1578 = vrcp.pop %v1574
          %v1579 = vmul.f32 %v1556, %v1575
          %v1580 = vmul.f32 %v1558, %v1576
          %v1581 = vmul.f32 %v1560, %v1577
          %v1582 = vmul.f32 %v1562, %v1578
          %v1583 = vpack.c.bf16 %v1579, %v1579
          %v1584 = vpack.c.bf16 %v1580, %v1580
          %v1585 = vpack.c.bf16 %v1581, %v1581
          %v1586 = vpack.c.bf16 %v1582, %v1582
          %v1588 = vsel %vm1538, %v1583, 0
          %vm1590 = vcmask 1043456
          %v1592 = vsel %vm1590, %v1448, 0
          %1594 = vmatpush.bf16.msra.mxu0 0
          %1595 = vmatpush.bf16.msra.mxu0 0
          %1596 = vmatpush.bf16.msra.mxu0 0
          %1597 = vmatpush.bf16.msra.mxu0 0
          %1598 = vmatpush.bf16.msra.mxu0 0
          %1599 = vmatpush.bf16.msra.mxu0 0
          %1600 = vmatpush.bf16.msra.mxu0 0
          %1601 = vmatpush.bf16.msra.mxu0 %v1592
          %1602 = vmatmul.bf16.gmra.mxu0 %v1588
          %v1603 = vpop.f32.mrf.mxu0
          %v1604 = vadd.f32 0.0, %v1603
          %v1605 = vpop.f32.mrf.mxu0
          %1606 = vdwg.mxu0
          %v1608 = vsel %vm1538, %v1584, 0
          %v1611 = vsel %vm1590, %v1451, 0
          %1613 = vmatpush.bf16.msra.mxu0 0
          %1614 = vmatpush.bf16.msra.mxu0 0
          %1615 = vmatpush.bf16.msra.mxu0 0
          %1616 = vmatpush.bf16.msra.mxu0 0
          %1617 = vmatpush.bf16.msra.mxu0 0
          %1618 = vmatpush.bf16.msra.mxu0 0
          %1619 = vmatpush.bf16.msra.mxu0 0
          %1620 = vmatpush.bf16.msra.mxu0 %v1611
          %1621 = vmatmul.bf16.gmra.mxu0 %v1608
          %v1622 = vpop.f32.mrf.mxu0
          %v1623 = vadd.f32 0.0, %v1622
          %v1624 = vpop.f32.mrf.mxu0
          %1625 = vdwg.mxu0
          %v1627 = vsel %vm1538, %v1585, 0
          %v1630 = vsel %vm1590, %v1454, 0
          %1632 = vmatpush.bf16.msra.mxu0 0
          %1633 = vmatpush.bf16.msra.mxu0 0
          %1634 = vmatpush.bf16.msra.mxu0 0
          %1635 = vmatpush.bf16.msra.mxu0 0
          %1636 = vmatpush.bf16.msra.mxu0 0
          %1637 = vmatpush.bf16.msra.mxu0 0
          %1638 = vmatpush.bf16.msra.mxu0 0
          %1639 = vmatpush.bf16.msra.mxu0 %v1630
          %1640 = vmatmul.bf16.gmra.mxu0 %v1627
          %v1641 = vpop.f32.mrf.mxu0
          %v1642 = vadd.f32 0.0, %v1641
          %v1643 = vpop.f32.mrf.mxu0
          %1644 = vdwg.mxu0
          %v1646 = vsel %vm1538, %v1586, 0
          %v1649 = vsel %vm1590, %v1457, 0
          %1651 = vmatpush.bf16.msra.mxu0 0
          %1652 = vmatpush.bf16.msra.mxu0 0
          %1653 = vmatpush.bf16.msra.mxu0 0
          %1654 = vmatpush.bf16.msra.mxu0 0
          %1655 = vmatpush.bf16.msra.mxu0 0
          %1656 = vmatpush.bf16.msra.mxu0 0
          %1657 = vmatpush.bf16.msra.mxu0 0
          %1658 = vmatpush.bf16.msra.mxu0 %v1649
          %1659 = vmatmul.bf16.gmra.mxu0 %v1646
          %v1660 = vpop.f32.mrf.mxu0
          %v1661 = vadd.f32 0.0, %v1660
          %v1662 = vpop.f32.mrf.mxu0
          %1663 = vdwg.mxu0
          %v1664 = vpack.c.bf16 %v1604, %v1604
          %v1665 = vpack.c.bf16 %v1623, %v1623
          %v1666 = vpack.c.bf16 %v1642, %v1642
          %v1667 = vpack.c.bf16 %v1661, %v1661
          %v1670 = vpack.i.b16 %v1665, %v1664
          %v1671 = vshrl.u32 %v1664, 16
          %v1672 = vshrl.u32 %v1665, 16
          %v1673 = vpack.i.b16 %v1672, %v1671
          %v1676 = vpack.i.b16 %v1667, %v1666
          %v1677 = vshrl.u32 %v1666, 16
          %v1678 = vshrl.u32 %v1667, 16
          %v1679 = vpack.i.b16 %v1678, %v1677
          %v1682 = vunpack.c.l.s4 1983009808
          %v1683 = vunpack.c.0.s8 %v1682
          %v1684 = vperm.slane %v1670, %v1683
          %v1687 = vunpack.c.l.s4 1983009808
          %v1688 = vunpack.c.0.s8 %v1687
          %v1689 = vperm.slane %v1676, %v1688
          %v1690 = vrot.slane %v1689, 4
          %v1691 = vsel %vm1124, %v1690, %v1684
          %v1692 = vrot.slane %v1684, 4
          %v1693 = vsel %vm1124, %v1689, %v1692
          %v1695 = vunpack.c.l.s4 1934713408
          %v1696 = vunpack.c.0.s8 %v1695
          %v1697 = vperm.slane %v1691, %v1696
          %v1699 = vunpack.c.l.s4 1934713408
          %v1700 = vunpack.c.0.s8 %v1699
          %v1701 = vperm.slane %v1693, %v1700
          %v1702 = vrot.slane %v1697, 4
          %v1703 = vsel %vm1124, 0, %v1702
          %v1704 = vrot.slane %v1701, 4
          %v1705 = vsel %vm1124, 0, %v1704
          %v1708 = vunpack.c.l.s4 1983009808
          %v1709 = vunpack.c.0.s8 %v1708
          %v1710 = vperm.slane %v1673, %v1709
          %v1713 = vunpack.c.l.s4 1983009808
          %v1714 = vunpack.c.0.s8 %v1713
          %v1715 = vperm.slane %v1679, %v1714
          %v1716 = vrot.slane %v1715, 4
          %v1717 = vsel %vm1124, %v1716, %v1710
          %v1718 = vrot.slane %v1710, 4
          %v1719 = vsel %vm1124, %v1715, %v1718
          %v1721 = vunpack.c.l.s4 1934713408
          %v1722 = vunpack.c.0.s8 %v1721
          %v1723 = vperm.slane %v1717, %v1722
          %v1725 = vunpack.c.l.s4 1934713408
          %v1726 = vunpack.c.0.s8 %v1725
          %v1727 = vperm.slane %v1719, %v1726
          %v1728 = vrot.slane %v1723, 4
          %v1729 = vsel %vm1124, 0, %v1728
          %v1730 = vrot.slane %v1727, 4
          %v1731 = vsel %vm1124, 0, %v1730
          %v1732 = vsel %vm1124, %v1704, %v1697
          %v1734 = vunpack.c.l.s4 1983009808
          %v1735 = vunpack.c.0.s8 %v1734
          %v1736 = vperm.slane %v1732, %v1735
          %v1737 = vrot.slane %v1705, 4
          %v1738 = vsel %vm1124, %v1737, %v1703
          %v1740 = vunpack.c.l.s4 1983009808
          %v1741 = vunpack.c.0.s8 %v1740
          %v1742 = vperm.slane %v1738, %v1741
          %v1743 = vrot.slane %v1742, 4
          %v1744 = vsel %vm1124, %v1743, %v1736
          %v1746 = vunpack.c.l.s4 1934713408
          %v1747 = vunpack.c.0.s8 %v1746
          %v1748 = vperm.slane %v1744, %v1747
          %v1749 = vrot.slane %v1748, 4
          %v1750 = vsel %vm1124, 0, %v1749
          %v1751 = vsel %vm1124, %v1730, %v1723
          %v1753 = vunpack.c.l.s4 1983009808
          %v1754 = vunpack.c.0.s8 %v1753
          %v1755 = vperm.slane %v1751, %v1754
          %v1756 = vrot.slane %v1731, 4
          %v1757 = vsel %vm1124, %v1756, %v1729
          %v1759 = vunpack.c.l.s4 1983009808
          %v1760 = vunpack.c.0.s8 %v1759
          %v1761 = vperm.slane %v1757, %v1760
          %v1762 = vrot.slane %v1761, 4
          %v1763 = vsel %vm1124, %v1762, %v1755
          %v1765 = vunpack.c.l.s4 1934713408
          %v1766 = vunpack.c.0.s8 %v1765
          %v1767 = vperm.slane %v1763, %v1766
          %v1768 = vrot.slane %v1767, 4
          %v1769 = vsel %vm1124, 0, %v1768
          %v1772 = vpack.i.b16 %v1767, %v1748
          %v1773 = vshrl.u32 %v1748, 16
          %v1774 = vshrl.u32 %v1767, 16
          %v1775 = vpack.i.b16 %v1774, %v1773
          %v1778 = vpack.i.b16 %v1769, %v1750
          %v1779 = vshrl.u32 %v1750, 16
          %v1780 = vshrl.u32 %v1769, 16
          %v1781 = vpack.i.b16 %v1780, %v1779
          %v1782 = vunpack.c.l.b16 %v1775
          %v1783 = vpack.c.b16 %v1782, %v1782
          %1784 = vrot.lane.b32.xlu0 %v1783, 32
          %v1785 = vpop.permute.xlu0 %1784
          %v1786 = vunpack.c.l.b16 %v1778
          %v1787 = vpack.c.b16 %v1786, %v1786
          %1788 = vrot.lane.b32.xlu0 %v1787, 64
          %v1789 = vpop.permute.xlu0 %1788
          %v1790 = vunpack.c.l.b16 %v1781
          %v1791 = vpack.c.b16 %v1790, %v1790
          %1792 = vrot.lane.b32.xlu0 %v1791, 96
          %v1793 = vpop.permute.xlu0 %1792
          %v1796 = vsel %vm1461, %v1772, %v1785
          %vm1797 = vcmask 523264
          %v1799 = vsel %vm1797, %v1796, %v1789
          %vm1800 = vcmask 785408
          %v1802 = vsel %vm1800, %v1799, %v1793
          %v1805 = vperm.slane %v848, 0
          %v1823 = vunpack.c.l.b16 %v831
          %v1824 = vunpack.c.l.b16 %v832
          %v1825 = vunpack.c.l.b16 %v833
          %v1826 = vunpack.c.l.b16 %v834
          %v1827 = vunpack.c.l.b16 %v835
          %v1828 = vunpack.c.l.b16 %v836
          %v1829 = vunpack.c.l.b16 %v837
          %v1830 = vunpack.c.l.b16 %v838
          %v1831 = vunpack.c.l.b16 %v839
          %v1832 = vunpack.c.l.b16 %v840
          %v1833 = vunpack.c.l.b16 %v841
          %v1834 = vunpack.c.l.b16 %v842
          %v1835 = vunpack.c.l.b16 %v843
          %v1836 = vunpack.c.l.b16 %v844
          %v1837 = vunpack.c.l.b16 %v845
          %v1838 = vunpack.c.l.b16 %v846
          %v1839 = vpack.c.b16 %v1824, %v1823
          %v1840 = vpack.c.b16 %v1826, %v1825
          %v1841 = vpack.c.b16 %v1828, %v1827
          %v1842 = vpack.c.b16 %v1830, %v1829
          %v1843 = vpack.c.b16 %v1832, %v1831
          %v1844 = vpack.c.b16 %v1834, %v1833
          %v1845 = vpack.c.b16 %v1836, %v1835
          %v1846 = vpack.c.b16 %v1838, %v1837
          %1855 = vmatpush.bf16.msra.mxu0 %v1846
          %1856 = vmatpush.bf16.msra.mxu0 %v1845
          %1857 = vmatpush.bf16.msra.mxu0 %v1844
          %1858 = vmatpush.bf16.msra.mxu0 %v1843
          %1859 = vmatpush.bf16.msra.mxu0 %v1842
          %1860 = vmatpush.bf16.msra.mxu0 %v1841
          %1861 = vmatpush.bf16.msra.mxu0 %v1840
          %1862 = vmatpush.bf16.msra.mxu0 %v1839
          %1863 = vmatmul.bf16.gmra.mxu0 %v1802
          %v1864 = vpop.f32.mrf.mxu0
          %v1865 = vadd.f32 %v1805, %v1864
          %v1866 = vpop.f32.mrf.mxu0
          %1867 = vdwg.mxu0
          %v1868 = vadd.f32 %v789, %v1865
          %1869 = vadd.xlane.f32.xlu0 %v1868
          %v1870 = vpop.xlane.xlu0 %1869
          %v1871 = vmul.f32 %v1870, %v755
          %v1872 = vsub.f32 %v1868, %v1871
          %v1873 = vmul.f32 %v1872, %v1872
          %1874 = vadd.xlane.f32.xlu0 %v1873
          %v1875 = vpop.xlane.xlu0 %1874
          %v1876 = vmul.f32 %v1875, %v755
          %v1877 = vadd.f32 %v1876, 1e-05
          %v1878 = vrsqrt.pop %v1877
          %v1879 = vmul.f32 %v1878, %v1877
          %v1880 = vmul.f32 %v1879, %v1878
          %v1881 = vmul.f32 0.5, %v1880
          %v1882 = vsub.f32 1.5, %v1881
          %v1883 = vmul.f32 %v1878, %v1882
          %vm1884 = vweird.f32 %v1877
          %vm1885 = vweird.f32 %v1878
          %vm1886 = vmor %vm1884, %vm1885
          %v1887 = vsel %vm1886, %v1878, %v1883
          %v1888 = vmul.f32 %v1872, %v1887
          %v1890 = vperm.slane %v850, 0
          %v1892 = vmul.f32 %v1888, %v1890
          %v1894 = vperm.slane %v852, 0
          %v1896 = vadd.f32 %v1892, %v1894
          %v1897 = vpack.c.bf16 %v1896, %v1896
          %v1899 = vperm.slane %v874, 0
          %v1900 = vperm.slane %v874, 1
          %v1919 = vunpack.c.l.b16 %v856
          %v1920 = vunpack.c.h.b16 %v856
          %v1921 = vunpack.c.l.b16 %v857
          %v1922 = vunpack.c.h.b16 %v857
          %v1923 = vunpack.c.l.b16 %v858
          %v1924 = vunpack.c.h.b16 %v858
          %v1925 = vunpack.c.l.b16 %v859
          %v1926 = vunpack.c.h.b16 %v859
          %v1927 = vunpack.c.l.b16 %v860
          %v1928 = vunpack.c.h.b16 %v860
          %v1929 = vunpack.c.l.b16 %v861
          %v1930 = vunpack.c.h.b16 %v861
          %v1931 = vunpack.c.l.b16 %v862
          %v1932 = vunpack.c.h.b16 %v862
          %v1933 = vunpack.c.l.b16 %v863
          %v1934 = vunpack.c.h.b16 %v863
          %v1935 = vunpack.c.l.b16 %v864
          %v1936 = vunpack.c.h.b16 %v864
          %v1937 = vunpack.c.l.b16 %v865
          %v1938 = vunpack.c.h.b16 %v865
          %v1939 = vunpack.c.l.b16 %v866
          %v1940 = vunpack.c.h.b16 %v866
          %v1941 = vunpack.c.l.b16 %v867
          %v1942 = vunpack.c.h.b16 %v867
          %v1943 = vunpack.c.l.b16 %v868
          %v1944 = vunpack.c.h.b16 %v868
          %v1945 = vunpack.c.l.b16 %v869
          %v1946 = vunpack.c.h.b16 %v869
          %v1947 = vunpack.c.l.b16 %v870
          %v1948 = vunpack.c.h.b16 %v870
          %v1949 = vunpack.c.l.b16 %v871
          %v1950 = vunpack.c.h.b16 %v871
          %v1951 = vpack.c.b16 %v1921, %v1919
          %v1952 = vpack.c.b16 %v1922, %v1920
          %v1953 = vpack.c.b16 %v1925, %v1923
          %v1954 = vpack.c.b16 %v1926, %v1924
          %v1955 = vpack.c.b16 %v1929, %v1927
          %v1956 = vpack.c.b16 %v1930, %v1928
          %v1957 = vpack.c.b16 %v1933, %v1931
          %v1958 = vpack.c.b16 %v1934, %v1932
          %v1959 = vpack.c.b16 %v1937, %v1935
          %v1960 = vpack.c.b16 %v1938, %v1936
          %v1961 = vpack.c.b16 %v1941, %v1939
          %v1962 = vpack.c.b16 %v1942, %v1940
          %v1963 = vpack.c.b16 %v1945, %v1943
          %v1964 = vpack.c.b16 %v1946, %v1944
          %v1965 = vpack.c.b16 %v1949, %v1947
          %v1966 = vpack.c.b16 %v1950, %v1948
          %1983 = vmatpush.bf16.msra.mxu0 %v1965
          %1984 = vmatpush.bf16.msra.mxu0 %v1963
          %1985 = vmatpush.bf16.msra.mxu0 %v1961
          %1986 = vmatpush.bf16.msra.mxu0 %v1959
          %1987 = vmatpush.bf16.msra.mxu0 %v1957
          %1988 = vmatpush.bf16.msra.mxu0 %v1955
          %1989 = vmatpush.bf16.msra.mxu0 %v1953
          %1990 = vmatpush.bf16.msra.mxu0 %v1951
          %1991 = vmatmul.bf16.gmra.mxu0 %v1897
          %v1992 = vpop.f32.mrf.mxu0
          %v1993 = vadd.f32 %v1899, %v1992
          %v1994 = vpop.f32.mrf.mxu0
          %1995 = vdwg.mxu0
          %1996 = vmatpush.bf16.msra.mxu0 %v1966
          %1997 = vmatpush.bf16.msra.mxu0 %v1964
          %1998 = vmatpush.bf16.msra.mxu0 %v1962
          %1999 = vmatpush.bf16.msra.mxu0 %v1960
          %2000 = vmatpush.bf16.msra.mxu0 %v1958
          %2001 = vmatpush.bf16.msra.mxu0 %v1956
          %2002 = vmatpush.bf16.msra.mxu0 %v1954
          %2003 = vmatpush.bf16.msra.mxu0 %v1952
          %2004 = vmatmul.bf16.gmra.mxu0 %v1897
          %v2005 = vpop.f32.mrf.mxu0
          %v2006 = vadd.f32 %v1900, %v2005
          %v2007 = vpop.f32.mrf.mxu0
          %2008 = vdwg.mxu0
          %v2009 = vmul.f32 %v1993, %v1993
          %v2010 = vmul.f32 %v2006, %v2006
          %v2011 = vmul.f32 %v1993, %v2009
          %v2012 = vmul.f32 %v2006, %v2010
          %v2013 = vmul.f32 %v2011, 0.044715
          %v2014 = vmul.f32 %v2012, 0.044715
          %v2015 = vadd.f32 %v1993, %v2013
          %v2016 = vadd.f32 %v2006, %v2014
          %v2017 = vmul.f32 %v2015, 0.7978846
          %v2018 = vmul.f32 %v2016, 0.7978846
          %v2019 = vtanh.pop %v2017
          %v2020 = vtanh.pop %v2018
          %v2021 = vadd.f32 %v2019, 1.0
          %v2022 = vadd.f32 %v2020, 1.0
          %v2023 = vmul.f32 %v2021, 0.5
          %v2024 = vmul.f32 %v2022, 0.5
          %v2025 = vmul.f32 %v1993, %v2023
          %v2026 = vmul.f32 %v2006, %v2024
          %v2027 = vpack.c.bf16 %v2025, %v2025
          %v2028 = vpack.c.bf16 %v2026, %v2026
          %v2030 = vperm.slane %v910, 0
          %v2064 = vunpack.c.l.b16 %v877
          %v2065 = vunpack.c.l.b16 %v878
          %v2066 = vunpack.c.l.b16 %v879
          %v2067 = vunpack.c.l.b16 %v880
          %v2068 = vunpack.c.l.b16 %v881
          %v2069 = vunpack.c.l.b16 %v882
          %v2070 = vunpack.c.l.b16 %v883
          %v2071 = vunpack.c.l.b16 %v884
          %v2072 = vunpack.c.l.b16 %v885
          %v2073 = vunpack.c.l.b16 %v886
          %v2074 = vunpack.c.l.b16 %v887
          %v2075 = vunpack.c.l.b16 %v888
          %v2076 = vunpack.c.l.b16 %v889
          %v2077 = vunpack.c.l.b16 %v890
          %v2078 = vunpack.c.l.b16 %v891
          %v2079 = vunpack.c.l.b16 %v892
          %v2080 = vunpack.c.l.b16 %v893
          %v2081 = vunpack.c.l.b16 %v894
          %v2082 = vunpack.c.l.b16 %v895
          %v2083 = vunpack.c.l.b16 %v896
          %v2084 = vunpack.c.l.b16 %v897
          %v2085 = vunpack.c.l.b16 %v898
          %v2086 = vunpack.c.l.b16 %v899
          %v2087 = vunpack.c.l.b16 %v900
          %v2088 = vunpack.c.l.b16 %v901
          %v2089 = vunpack.c.l.b16 %v902
          %v2090 = vunpack.c.l.b16 %v903
          %v2091 = vunpack.c.l.b16 %v904
          %v2092 = vunpack.c.l.b16 %v905
          %v2093 = vunpack.c.l.b16 %v906
          %v2094 = vunpack.c.l.b16 %v907
          %v2095 = vunpack.c.l.b16 %v908
          %v2096 = vpack.c.b16 %v2065, %v2064
          %v2097 = vpack.c.b16 %v2067, %v2066
          %v2098 = vpack.c.b16 %v2069, %v2068
          %v2099 = vpack.c.b16 %v2071, %v2070
          %v2100 = vpack.c.b16 %v2073, %v2072
          %v2101 = vpack.c.b16 %v2075, %v2074
          %v2102 = vpack.c.b16 %v2077, %v2076
          %v2103 = vpack.c.b16 %v2079, %v2078
          %v2104 = vpack.c.b16 %v2081, %v2080
          %v2105 = vpack.c.b16 %v2083, %v2082
          %v2106 = vpack.c.b16 %v2085, %v2084
          %v2107 = vpack.c.b16 %v2087, %v2086
          %v2108 = vpack.c.b16 %v2089, %v2088
          %v2109 = vpack.c.b16 %v2091, %v2090
          %v2110 = vpack.c.b16 %v2093, %v2092
          %v2111 = vpack.c.b16 %v2095, %v2094
          %2128 = vmatpush.bf16.msra.mxu0 %v2103
          %2129 = vmatpush.bf16.msra.mxu0 %v2102
          %2130 = vmatpush.bf16.msra.mxu0 %v2101
          %2131 = vmatpush.bf16.msra.mxu0 %v2100
          %2132 = vmatpush.bf16.msra.mxu0 %v2099
          %2133 = vmatpush.bf16.msra.mxu0 %v2098
          %2134 = vmatpush.bf16.msra.mxu0 %v2097
          %2135 = vmatpush.bf16.msra.mxu0 %v2096
          %2136 = vmatmul.bf16.gmra.mxu0 %v2027
          %v2137 = vpop.f32.mrf.mxu0
          %v2138 = vadd.f32 %v2030, %v2137
          %v2139 = vpop.f32.mrf.mxu0
          %2140 = vdwg.mxu0
          %2141 = vmatpush.bf16.msra.mxu0 %v2111
          %2142 = vmatpush.bf16.msra.mxu0 %v2110
          %2143 = vmatpush.bf16.msra.mxu0 %v2109
          %2144 = vmatpush.bf16.msra.mxu0 %v2108
          %2145 = vmatpush.bf16.msra.mxu0 %v2107
          %2146 = vmatpush.bf16.msra.mxu0 %v2106
          %2147 = vmatpush.bf16.msra.mxu0 %v2105
          %2148 = vmatpush.bf16.msra.mxu0 %v2104
          %2149 = vmatmul.bf16.gmra.mxu0 %v2028
          %v2150 = vpop.f32.mrf.mxu0
          %v2151 = vadd.f32 %v2138, %v2150
          %v2152 = vpop.f32.mrf.mxu0
          %2153 = vdwg.mxu0
          %v2154 = vadd.f32 %v1896, %v2151
          %2155 = vadd.xlane.f32.xlu0 %v2154
          %v2156 = vpop.xlane.xlu0 %2155
          %v2157 = vmul.f32 %v2156, %v755
          %v2158 = vsub.f32 %v2154, %v2157
          %v2159 = vmul.f32 %v2158, %v2158
          %2160 = vadd.xlane.f32.xlu0 %v2159
          %v2161 = vpop.xlane.xlu0 %2160
          %v2162 = vmul.f32 %v2161, %v755
          %v2163 = vadd.f32 %v2162, 1e-05
          %v2164 = vrsqrt.pop %v2163
          %v2165 = vmul.f32 %v2164, %v2163
          %v2166 = vmul.f32 %v2165, %v2164
          %v2167 = vmul.f32 0.5, %v2166
          %v2168 = vsub.f32 1.5, %v2167
          %v2169 = vmul.f32 %v2164, %v2168
          %vm2170 = vweird.f32 %v2163
          %vm2171 = vweird.f32 %v2164
          %vm2172 = vmor %vm2170, %vm2171
          %v2173 = vsel %vm2172, %v2164, %v2169
          %v2174 = vmul.f32 %v2158, %v2173
          %v2176 = vperm.slane %v912, 0
          %v2178 = vmul.f32 %v2174, %v2176
          %v2180 = vperm.slane %v914, 0
          %v2182 = vadd.f32 %v2178, %v2180
        $region137: #{tpu_custom_call.1} parent=87 // loop_footer
          %s788 = sadd.s32 1, %s784
        $region138: #{tpu_custom_call.1} parent=87 // loop_footer_branch
          %783 = sbr.rel target = $region134
        $region139: #{tpu_custom_call.1} parent=87 // loop_exit
          _
        %2183 = vst [vmem:[%s735] sm:$0xff] %v789
        %s2184 = sand.u32 %s414, 1
        %s2185 = scalar_lea.sflag [#allocation4], %s2184
        %s2186 = sand.u32 %s414, 1
        %s2187 = smul.addr %s2186, 8
        %s2188 = scalar_lea.vmem [#allocation20], %s2187
        // Predicated region
        $region140: #{tpu_custom_call.1} parent=87 // pred_check
          %p2189 = pneg %p424
        $region141: #{tpu_custom_call.1} parent=87 // pred_check_branch
          %2191 = sbr.rel (%p2189) target = $region143
        $region142: #{tpu_custom_call.1} parent=87 // pred_region
          %2193 = vsyncadd %s2185, 0
          %s2194 = smul.addr %s39, 8
          %s2195 = scalar_lea.hbm %s17, %s2194
          %s2197 = sshll.u32 %s2188, 4
          %s2198 = int_to_ptr.vmem [resolvable:$true] %s2197
          %s2199 = sshll.u32 %s2195, 4
          %s2200 = int_to_ptr.hbm [resolvable:$true] %s2199
          %2202 = dma.vmem_to_hbm [thread:$0]  %s2198, 128, %s2200, %s2185
        $region143: #{tpu_custom_call.1} parent=87 // pred_fallthru
          _
      $region88: #{tpu_custom_call.1} parent=5 // pred_fallthru
        _
      %p2203 = scmp.le.s32.totalorder 2, %s34
      // Predicated region
      $region144: #{tpu_custom_call.1} parent=5 // pred_check
        %p2204 = pneg %p2203
      $region145: #{tpu_custom_call.1} parent=5 // pred_check_branch
        %2206 = sbr.rel (%p2204) target = $region147
      $region146: #{tpu_custom_call.1} parent=5 // pred_region
        %s2207 = ssub.s32 %s34, 2
        // Predicated region
        $region148: #{tpu_custom_call.1} parent=146 // pred_check
          %p2208 = pneg %p430
        $region149: #{tpu_custom_call.1} parent=146 // pred_check_branch
          %2210 = sbr.rel (%p2208) target = $region151
        $region150: #{tpu_custom_call.1} parent=146 // pred_region
          %s2211 = sand.u32 %s415, 1
          %s2212 = scalar_lea.sflag [#allocation4], %s2211
          %s2213 = sand.u32 %s415, 1
          %s2214 = smul.addr %s2213, 8
          %s2215 = scalar_lea.vmem [#allocation20], %s2214
          %2217 = dma.done %s2212, 128
        $region151: #{tpu_custom_call.1} parent=146 // pred_fallthru
          _
      $region147: #{tpu_custom_call.1} parent=5 // pred_fallthru
        _
    $region6: #{tpu_custom_call.1} parent=1 // loop_footer
      %s38 = sadd.s32 1, %s34
    $region7: #{tpu_custom_call.1} parent=1 // loop_footer_branch
      %33 = sbr.rel target = $region3
    $region8: #{tpu_custom_call.1} parent=1 // loop_exit
      _
    %2218 = vsyncpa [#allocation3], 1
    %s2219 = scalar_lea.sflag [#allocation3], 1
    %2220 = vsyncpa %s2219, 1
    %2221 = vsyncpa [#allocation6], 1
    %2222 = vsyncpa [#allocation9], 1
    %2223 = vsyncpa [#allocation12], 1
    %2224 = vsyncpa [#allocation15], 1
    %2225 = vsyncpa [#allocation18], 1
    %2226 = vsyncpa [#allocation4], 1
    %s2227 = scalar_lea.sflag [#allocation4], 1
    %2228 = vsyncpa %s2227, 1

</llo_original>
